<compile_context>
chip_gen: v7x
topology: tpu7x:2x2x1
jax: 0.10.0
libtpu: 0.0.40
codegen_flags: <defaults>
</compile_context>

<pallas_src>
import math
import numpy as np
import jax
import jax.numpy as jnp
from jax.experimental import pallas as pl
from jax.experimental.pallas import tpu as pltpu


def _sigmoid(x):
    # sigmoid(x) = 0.5 * (tanh(0.5 x) + 1): one EUP transcendental.
    return 0.5 * jnp.tanh(0.5 * x) + 0.5


def _reorder_gates(w, H):
    """PyTorch gate order (i, f, g, o) -> kernel order (i, f, o, g) on axis 0."""
    i, f, g, o = w[:H], w[H:2 * H], w[2 * H:3 * H], w[3 * H:4 * H]
    return jnp.concatenate([i, f, o, g], axis=0)


def _make_lstm_layer_kernel(seq_len, t_blk, needs_mask, unroll):
    """Builds one LSTM-layer kernel body.

    Grid: (batch_blocks, time_blocks); time is the inner ("arbitrary") axis.
      gx_ref:    (t_blk, b_blk, 4H)  x @ W_ih^T + bias, gate order (i, f, o, g)
      whh_ref:   (H, 4H)             W_hh^T (resident, single-buffered, bf16)
      h0/c0:     (b_blk, H) f32      initial state
      y_ref:     (t_blk, b_blk, H)   per-step hidden output
      hn/cn:     (b_blk, H) f32      final state (written on last time block)
      h_sc/c_sc: (b_blk, H) f32      carries across time blocks
    """

    def kernel(gx_ref, whh_ref, h0_ref, c0_ref, y_ref, hn_ref, cn_ref,
               h_sc, c_sc):
        tb = pl.program_id(1)

        @pl.when(tb == 0)
        def _():
            h_sc[...] = h0_ref[...].astype(jnp.float32)
            c_sc[...] = c0_ref[...].astype(jnp.float32)

        H = h_sc.shape[-1]
        whh = whh_ref[...]                       # compute dtype (bf16 / f32)
        t_base = tb * t_blk

        def step(tt, carry):
            # Only the recurrent matmul + pointwise tail sit on the serial
            # path; h/c stay in vregs (f32) within the time block.
            h, c = carry
            gates = gx_ref[tt].astype(jnp.float32) + jnp.dot(
                h.astype(whh.dtype), whh, preferred_element_type=jnp.float32)

            ifo = _sigmoid(gates[:, :3 * H])     # i, f, o in one EUP sweep
            g_g = jnp.tanh(gates[:, 3 * H:])
            i_g = ifo[:, 0 * H:1 * H]
            f_g = ifo[:, 1 * H:2 * H]
            o_g = ifo[:, 2 * H:3 * H]

            c_new = f_g * c + i_g * g_g
            h_new = o_g * jnp.tanh(c_new)
            y_ref[tt] = h_new.astype(y_ref.dtype)

            if needs_mask:
                valid = (t_base + tt) < seq_len
                h_new = jnp.where(valid, h_new, h)
                c_new = jnp.where(valid, c_new, c)
            return h_new, c_new

        h, c = jax.lax.fori_loop(0, t_blk, step, (h_sc[...], c_sc[...]),
                                 unroll=unroll)
        h_sc[...] = h
        c_sc[...] = c

        @pl.when(tb == pl.num_programs(1) - 1)
        def _():
            hn_ref[...] = h_sc[...].astype(hn_ref.dtype)
            cn_ref[...] = c_sc[...].astype(cn_ref.dtype)

    return kernel


def _choose_time_block(S, b_blk, H, *, gx_itemsize, y_itemsize, whh_itemsize,
                       max_time_block, vmem_budget_bytes):
    """Pick t_blk from an explicit VMEM budget; returns (t_blk, required_bytes)."""
    fixed = H * 4 * H * whh_itemsize               # W_hh^T, Buffered(1)
    fixed += 2 * 2 * b_blk * H * 4                 # h0, c0 (double-buffered, f32)
    fixed += 2 * 2 * b_blk * H * 4                 # hn, cn outputs (f32)
    fixed += 2 * b_blk * H * 4                     # f32 carry scratch
    per_t = (2 * b_blk * 4 * H * gx_itemsize       # gx, double-buffered
             + 2 * b_blk * H * y_itemsize)         # y,  double-buffered
    avail = max(vmem_budget_bytes - fixed, per_t)
    t_blk = int(max(1, min(max_time_block, S, avail // per_t)))
    return t_blk, fixed + t_blk * per_t


def _lstm_layer(gx_sbd, whh_t, h0, c0, *, seq_len, t_blk, b_blk, unroll,
                vmem_limit_bytes, y_dtype):
    """Run one LSTM layer over the (possibly padded) sequence.

    gx_sbd: (S_pad, B, 4H) hoisted projection, time-major, gate order (i,f,o,g)
    whh_t:  (H, 4H)        W_hh^T in compute dtype
    h0/c0:  (B, H) f32
    Returns y (seq_len, B, H) time-major, h_n (B, H) f32, c_n (B, H) f32.
    """
    S_pad, B, G = gx_sbd.shape
    H = whh_t.shape[0]
    assert G == 4 * H and S_pad % t_blk == 0 and B % b_blk == 0

    grid = (B // b_blk, S_pad // t_blk)
    kernel = _make_lstm_layer_kernel(seq_len, t_blk, seq_len != S_pad, unroll)

    out_shapes = (
        jax.ShapeDtypeStruct((S_pad, B, H), y_dtype),   # per-step hidden
        jax.ShapeDtypeStruct((B, H), jnp.float32),      # h_n
        jax.ShapeDtypeStruct((B, H), jnp.float32),      # c_n
    )
    y, hn, cn = pl.pallas_call(
        kernel,
        out_shape=out_shapes,
        grid=grid,
        in_specs=[
            pl.BlockSpec((t_blk, b_blk, 4 * H), lambda b, t: (t, b, 0)),  # gx
            pl.BlockSpec((H, 4 * H), lambda b, t: (0, 0),
                         pipeline_mode=pl.Buffered(1)),                   # W_hh^T
            pl.BlockSpec((b_blk, H), lambda b, t: (b, 0)),                # h0
            pl.BlockSpec((b_blk, H), lambda b, t: (b, 0)),                # c0
        ],
        out_specs=(
            pl.BlockSpec((t_blk, b_blk, H), lambda b, t: (t, b, 0)),
            pl.BlockSpec((b_blk, H), lambda b, t: (b, 0)),
            pl.BlockSpec((b_blk, H), lambda b, t: (b, 0)),
        ),
        scratch_shapes=[
            pltpu.VMEM((b_blk, H), jnp.float32),   # h carry
            pltpu.VMEM((b_blk, H), jnp.float32),   # c carry
        ],
        compiler_params=pltpu.CompilerParams(
            dimension_semantics=("parallel", "arbitrary"),
            vmem_limit_bytes=vmem_limit_bytes),
    )(gx_sbd, whh_t, h0, c0)
    return y[:seq_len], hn, cn


class PallasLSTM:
    """Mirrors nn.LSTM(batch_first=True, bidirectional=False) forward."""

    def __init__(self, input_size, hidden_size, num_layers, dropout=0,
                 key=jax.random.PRNGKey(0), compute_dtype=jnp.bfloat16,
                 gx_dtype=jnp.bfloat16, max_time_block=32, num_tensorcores=1,
                 vmem_budget_bytes=24 * 1024 * 1024):
        self.input_size = input_size
        self.hidden_size = hidden_size
        self.num_layers = num_layers
        self.dropout = dropout
        self.compute_dtype = compute_dtype     # dtype fed to the MXU
        self.gx_dtype = gx_dtype               # dtype of gx / intermediate y
        self.max_time_block = max_time_block
        self.num_tensorcores = num_tensorcores  # set 2 on v7x for large B
        self.vmem_budget_bytes = vmem_budget_bytes

        H = hidden_size
        k = 1.0 / math.sqrt(H)
        # PyTorch-order (i, f, g, o) parameters (kept for the reference path).
        self.w_ih, self.w_hh, self.b_ih, self.b_hh = [], [], [], []
        # Kernel-order (i, f, o, g) packed weights (transposed, compute dtype).
        self._wih_t, self._whh_t, self._bias = [], [], []
        for layer in range(num_layers):
            in_sz = input_size if layer == 0 else H
            key, k1, k2, k3, k4 = jax.random.split(key, 5)
            w_ih = jax.random.uniform(k1, (4 * H, in_sz), jnp.float32, -k, k)
            w_hh = jax.random.uniform(k2, (4 * H, H), jnp.float32, -k, k)
            b_ih = jax.random.uniform(k3, (4 * H,), jnp.float32, -k, k)
            b_hh = jax.random.uniform(k4, (4 * H,), jnp.float32, -k, k)
            self.w_ih.append(w_ih)
            self.w_hh.append(w_hh)
            self.b_ih.append(b_ih)
            self.b_hh.append(b_hh)
            self._wih_t.append(_reorder_gates(w_ih, H).T.astype(compute_dtype))
            self._whh_t.append(_reorder_gates(w_hh, H).T.astype(compute_dtype))
            self._bias.append(_reorder_gates(b_ih + b_hh, H))   # f32

    def __call__(self, x, state=None):
        # x: (B, S, input_size), batch_first
        B, S, _ = x.shape
        H, L = self.hidden_size, self.num_layers
        cd, gd = self.compute_dtype, self.gx_dtype
        if state is None:
            h0 = jnp.zeros((L, B, H), jnp.float32)
            c0 = jnp.zeros((L, B, H), jnp.float32)
        else:
            h0, c0 = state
            h0 = h0.astype(jnp.float32)
            c0 = c0.astype(jnp.float32)

        # ---- tiling decisions (VMEM-budget aware) -----------------------
        nc = self.num_tensorcores
        if nc >= 2 and B % nc == 0 and (B // nc) % 8 == 0:
            b_blk = B // nc          # v7x only: split batch across the 2 TCs
        else:
            b_blk = B                # single-TC chips: never split
        t_blk, vmem_required = _choose_time_block(
            S, b_blk, H,
            gx_itemsize=jnp.dtype(gd).itemsize,
            y_itemsize=jnp.dtype(gd).itemsize,
            whh_itemsize=jnp.dtype(cd).itemsize,
            max_time_block=self.max_time_block,
            vmem_budget_bytes=self.vmem_budget_bytes)
        S_pad = ((S + t_blk - 1) // t_blk) * t_blk
        unroll = max(1, min(8, t_blk))
        vmem_limit = int(min(64 * 1024 * 1024,
                             max(32 * 1024 * 1024,
                                 vmem_required + 8 * 1024 * 1024)))

        # ---- layer stack --------------------------------------------------
        x_sbd = jnp.transpose(x, (1, 0, 2))      # (S, B, D), time-major
        h_fin, c_fin = [], []
        for layer in range(L):
            d_in = x_sbd.shape[-1]
            # Hoisted input projection: one big bf16 MXU matmul per layer,
            # off the serial recurrence; streamed to the kernel in gx_dtype.
            gx = (jnp.dot(x_sbd.astype(cd).reshape(S * B, d_in),
                          self._wih_t[layer],
                          preferred_element_type=jnp.float32)
                  + self._bias[layer]).astype(gd).reshape(S, B, 4 * H)
            if S_pad != S:
                gx = jnp.pad(gx, ((0, S_pad - S), (0, 0), (0, 0)))
            # TODO(synk): overlap next layer's projection with this layer's
            #             recurrence (wavefront across layers) for deep stacks.
            y, hn, cn = _lstm_layer(
                gx, self._whh_t[layer], h0[layer], c0[layer],
                seq_len=S, t_blk=t_blk, b_blk=b_blk, unroll=unroll,
                vmem_limit_bytes=vmem_limit, y_dtype=gd)
            # TODO(synk): inter-layer dropout (training mode) not applied.
            x_sbd = y
            h_fin.append(hn)
            c_fin.append(cn)

        output = jnp.transpose(x_sbd, (1, 0, 2)).astype(x.dtype)  # (B, S, H)
        h_n = jnp.stack(h_fin, axis=0).astype(x.dtype)            # (L, B, H)
        c_n = jnp.stack(c_fin, axis=0).astype(x.dtype)            # (L, B, H)
        return output, (h_n, c_n)


def _reference_lstm(model, x, state=None):
    """Pure-JAX reference (lax.scan) with the same precision policy."""
    B, S, _ = x.shape
    H, L = model.hidden_size, model.num_layers
    cd, gd = model.compute_dtype, model.gx_dtype
    if state is None:
        h0 = jnp.zeros((L, B, H), jnp.float32)
        c0 = jnp.zeros((L, B, H), jnp.float32)
    else:
        h0, c0 = state
        h0 = h0.astype(jnp.float32)
        c0 = c0.astype(jnp.float32)
    seq = jnp.transpose(x, (1, 0, 2))            # (S, B, D)
    h_fin, c_fin = [], []
    for layer in range(L):
        wih_t = model.w_ih[layer].T.astype(cd)
        whh_t = model.w_hh[layer].T.astype(cd)
        b = model.b_ih[layer] + model.b_hh[layer]
        gx = (jnp.dot(seq.astype(cd), wih_t,
                      preferred_element_type=jnp.float32) + b).astype(gd)

        def step(carry, gx_t, whh_t=whh_t):
            h, c = carry
            g = gx_t.astype(jnp.float32) + jnp.dot(
                h.astype(whh_t.dtype), whh_t, preferred_element_type=jnp.float32)
            i, f, gg, o = jnp.split(g, 4, axis=-1)
            c = jax.nn.sigmoid(f) * c + jax.nn.sigmoid(i) * jnp.tanh(gg)
            h = jax.nn.sigmoid(o) * jnp.tanh(c)
            return (h, c), h.astype(gd)

        (hn, cn), ys = jax.lax.scan(step, (h0[layer], c0[layer]), gx)
        seq = ys
        h_fin.append(hn)
        c_fin.append(cn)
    return (jnp.transpose(seq, (1, 0, 2)).astype(x.dtype),
            (jnp.stack(h_fin, 0).astype(x.dtype),
             jnp.stack(c_fin, 0).astype(x.dtype)))


if __name__ == "__main__":
    B, S, D, H, L = 2, 8, 16, 32, 2
    key = jax.random.PRNGKey(0)
    kx, kp, kh, kc = jax.random.split(key, 4)
    x = jax.random.normal(kx, (B, S, D), jnp.float32)

    # 1) Default perf mode (bf16 MXU / bf16 HBM streams, f32 carries).
    model = PallasLSTM(input_size=D, hidden_size=H, num_layers=L, dropout=0,
                       key=kp)
    out, (h_n, c_n) = model(x)
    jax.block_until_ready((out, h_n, c_n))
    ref_out, (ref_h, ref_c) = _reference_lstm(model, x)
    np.testing.assert_allclose(np.asarray(out), np.asarray(ref_out),
                               atol=2e-3, rtol=2e-3)
    np.testing.assert_allclose(np.asarray(h_n), np.asarray(ref_h),
                               atol=2e-3, rtol=2e-3)
    np.testing.assert_allclose(np.asarray(c_n), np.asarray(ref_c),
                               atol=2e-3, rtol=2e-3)

    # 2) Full-f32 mode: exact nn.LSTM math (zero and explicit initial state).
    model32 = PallasLSTM(input_size=D, hidden_size=H, num_layers=L, dropout=0,
                         key=kp, compute_dtype=jnp.float32,
                         gx_dtype=jnp.float32)
    out32, (h32, c32) = model32(x)
    jax.block_until_ready((out32, h32, c32))
    r_out32, (r_h32, r_c32) = _reference_lstm(model32, x)
    np.testing.assert_allclose(np.asarray(out32), np.asarray(r_out32),
                               atol=1e-4, rtol=1e-4)
    np.testing.assert_allclose(np.asarray(h32), np.asarray(r_h32),
                               atol=1e-4, rtol=1e-4)
    np.testing.assert_allclose(np.asarray(c32), np.asarray(r_c32),
                               atol=1e-4, rtol=1e-4)

    h0 = 0.1 * jax.random.normal(kh, (L, B, H), jnp.float32)
    c0 = 0.1 * jax.random.normal(kc, (L, B, H), jnp.float32)
    out_s, (h_s, c_s) = model32(x, (h0, c0))
    jax.block_until_ready((out_s, h_s, c_s))
    r_out_s, (r_h_s, r_c_s) = _reference_lstm(model32, x, (h0, c0))
    np.testing.assert_allclose(np.asarray(out_s), np.asarray(r_out_s),
                               atol=1e-4, rtol=1e-4)
    np.testing.assert_allclose(np.asarray(h_s), np.asarray(r_h_s),
                               atol=1e-4, rtol=1e-4)
    np.testing.assert_allclose(np.asarray(c_s), np.asarray(r_c_s),
                               atol=1e-4, rtol=1e-4)

    # 3) Ragged-S path: force t_blk=3 so S=8 is padded to 9 and masked.
    model_pad = PallasLSTM(input_size=D, hidden_size=H, num_layers=L,
                           dropout=0, key=kp, compute_dtype=jnp.float32,
                           gx_dtype=jnp.float32, max_time_block=3)
    out_p, (h_p, c_p) = model_pad(x, (h0, c0))
    jax.block_until_ready((out_p, h_p, c_p))
    np.testing.assert_allclose(np.asarray(out_p), np.asarray(r_out_s),
                               atol=1e-4, rtol=1e-4)
    np.testing.assert_allclose(np.asarray(h_p), np.asarray(r_h_s),
                               atol=1e-4, rtol=1e-4)
    np.testing.assert_allclose(np.asarray(c_p), np.asarray(r_c_s),
                               atol=1e-4, rtol=1e-4)

    assert out.shape == (B, S, H)
    assert h_n.shape == (L, B, H) and c_n.shape == (L, B, H)
    print("KERNEL_OK")
</pallas_src>

<mosaic_0001>
module attributes {stable_mosaic.version = 11 : i64} {
  func.func @kernel(%arg0: i32, %arg1: i32, %arg2: memref<8x2x128xbf16, #tpu.memory_space<vmem>>, %arg3: memref<32x128xbf16, #tpu.memory_space<vmem>>, %arg4: memref<2x32xf32, #tpu.memory_space<vmem>>, %arg5: memref<2x32xf32, #tpu.memory_space<vmem>>, %arg6: memref<8x2x32xbf16, #tpu.memory_space<vmem>>, %arg7: memref<2x32xf32, #tpu.memory_space<vmem>>, %arg8: memref<2x32xf32, #tpu.memory_space<vmem>>, %arg9: memref<2x32xf32, #tpu.memory_space<vmem>>, %arg10: memref<2x32xf32, #tpu.memory_space<vmem>>) attributes {dimension_semantics = [#tpu.dimension_semantics<parallel>, #tpu.dimension_semantics<arbitrary>], iteration_bounds = array<i64: 1, 1>, scalar_prefetch = 0 : i64, scratch_operands = 2 : i64, tpu.core_type = #tpu.core_type<tc>, window_params = [{transform_indices = @transform_0, window_bounds = array<i64: 8, 2, 128>}, {pipeline_mode = #tpu.pipeline_mode<synchronous>, transform_indices = @transform_1, window_bounds = array<i64: 32, 128>}, {transform_indices = @transform_2, window_bounds = array<i64: 2, 32>}, {transform_indices = @transform_3, window_bounds = array<i64: 2, 32>}, {transform_indices = @transform_4, window_bounds = array<i64: 8, 2, 32>}, {transform_indices = @transform_5, window_bounds = array<i64: 2, 32>}, {transform_indices = @transform_6, window_bounds = array<i64: 2, 32>}]} {
    %c0_i32 = arith.constant 0 : i32
    %0 = arith.cmpi eq, %arg1, %c0_i32 : i32
    %1 = arith.extui %0 : i1 to i32
    %c0_i32_0 = arith.constant 0 : i32
    %2 = arith.cmpi ne, %1, %c0_i32_0 : i32
    scf.if %2 {
      %c0_76 = arith.constant 0 : index
      %c0_77 = arith.constant 0 : index
      %251 = vector.load %arg4[%c0_76, %c0_77] : memref<2x32xf32, #tpu.memory_space<vmem>>, vector<2x32xf32>
      %c0_78 = arith.constant 0 : index
      %c0_79 = arith.constant 0 : index
      %252 = vector.load %arg9[%c0_78, %c0_79] : memref<2x32xf32, #tpu.memory_space<vmem>>, vector<2x32xf32>
      tpu.vector_store %arg9[%c0_78, %c0_79], %251 {strides = array<i32>} : memref<2x32xf32, #tpu.memory_space<vmem>>, vector<2x32xf32>,
      %c0_80 = arith.constant 0 : index
      %c0_81 = arith.constant 0 : index
      %253 = vector.load %arg5[%c0_80, %c0_81] : memref<2x32xf32, #tpu.memory_space<vmem>>, vector<2x32xf32>
      %c0_82 = arith.constant 0 : index
      %c0_83 = arith.constant 0 : index
      %254 = vector.load %arg10[%c0_82, %c0_83] : memref<2x32xf32, #tpu.memory_space<vmem>>, vector<2x32xf32>
      tpu.vector_store %arg10[%c0_82, %c0_83], %253 {strides = array<i32>} : memref<2x32xf32, #tpu.memory_space<vmem>>, vector<2x32xf32>,
    } else {
    }
    %c0 = arith.constant 0 : index
    %c0_1 = arith.constant 0 : index
    %3 = vector.load %arg3[%c0, %c0_1] : memref<32x128xbf16, #tpu.memory_space<vmem>>, vector<32x128xbf16>
    %c0_2 = arith.constant 0 : index
    %c0_3 = arith.constant 0 : index
    %4 = vector.load %arg9[%c0_2, %c0_3] : memref<2x32xf32, #tpu.memory_space<vmem>>, vector<2x32xf32>
    %c0_4 = arith.constant 0 : index
    %c0_5 = arith.constant 0 : index
    %5 = vector.load %arg10[%c0_4, %c0_5] : memref<2x32xf32, #tpu.memory_space<vmem>>, vector<2x32xf32>
    %c0_i32_6 = arith.constant 0 : i32
    %6 = arith.index_cast %c0_i32_6 : i32 to index
    %c0_7 = arith.constant 0 : index
    %c0_8 = arith.constant 0 : index
    %7 = vector.load %arg2[%6, %c0_7, %c0_8] : memref<8x2x128xbf16, #tpu.memory_space<vmem>>, vector<1x2x128xbf16>
    %8 = vector.shape_cast %7 : vector<1x2x128xbf16> to vector<2x128xbf16>
    %9 = arith.extf %8 : vector<2x128xbf16> to vector<2x128xf32>
    %10 = arith.truncf %4 : vector<2x32xf32> to vector<2x32xbf16>
    %cst = arith.constant dense<0.000000e+00> : vector<2x128xf32>
    %11 = tpu.matmul %10, %3, %cst {dimension_numbers = #tpu.dot_dimension_numbers<[1], [0], [0], [1], [0, 0, 1, 1], [], []>} : vector<2x32xbf16>, vector<32x128xbf16>, vector<2x128xf32> -> vector<2x128xf32>
    %12 = arith.addf %9, %11 : vector<2x128xf32>
    %13 = vector.extract_strided_slice %12 {offsets = [0, 0], sizes = [2, 96], strides = [1, 1]} : vector<2x128xf32> to vector<2x96xf32>
    %cst_9 = arith.constant 5.000000e-01 : f32
    %14 = vector.broadcast %cst_9 : f32 to vector<2x96xf32>
    %15 = arith.mulf %14, %13 : vector<2x96xf32>
    %16 = math.tanh %15 : vector<2x96xf32>
    %cst_10 = arith.constant 5.000000e-01 : f32
    %17 = vector.broadcast %cst_10 : f32 to vector<2x96xf32>
    %18 = arith.mulf %17, %16 : vector<2x96xf32>
    %cst_11 = arith.constant 5.000000e-01 : f32
    %19 = vector.broadcast %cst_11 : f32 to vector<2x96xf32>
    %20 = arith.addf %18, %19 : vector<2x96xf32>
    %21 = vector.extract_strided_slice %12 {offsets = [0, 96], sizes = [2, 32], strides = [1, 1]} : vector<2x128xf32> to vector<2x32xf32>
    %22 = math.tanh %21 : vector<2x32xf32>
    %23 = vector.extract_strided_slice %20 {offsets = [0, 0], sizes = [2, 32], strides = [1, 1]} : vector<2x96xf32> to vector<2x32xf32>
    %24 = vector.extract_strided_slice %20 {offsets = [0, 32], sizes = [2, 32], strides = [1, 1]} : vector<2x96xf32> to vector<2x32xf32>
    %25 = vector.extract_strided_slice %20 {offsets = [0, 64], sizes = [2, 32], strides = [1, 1]} : vector<2x96xf32> to vector<2x32xf32>
    %26 = arith.mulf %24, %5 : vector<2x32xf32>
    %27 = arith.mulf %23, %22 : vector<2x32xf32>
    %28 = arith.addf %26, %27 : vector<2x32xf32>
    %29 = math.tanh %28 : vector<2x32xf32>
    %30 = arith.mulf %25, %29 : vector<2x32xf32>
    %31 = arith.truncf %30 : vector<2x32xf32> to vector<2x32xbf16>
    %32 = arith.index_cast %c0_i32_6 : i32 to index
    %c0_12 = arith.constant 0 : index
    %c0_13 = arith.constant 0 : index
    %33 = vector.load %arg6[%32, %c0_12, %c0_13] : memref<8x2x32xbf16, #tpu.memory_space<vmem>>, vector<1x2x32xbf16>
    %34 = vector.shape_cast %33 : vector<1x2x32xbf16> to vector<2x32xbf16>
    %35 = vector.shape_cast %31 : vector<2x32xbf16> to vector<1x2x32xbf16>
    tpu.vector_store %arg6[%32, %c0_12, %c0_13], %35 {strides = array<i32>} : memref<8x2x32xbf16, #tpu.memory_space<vmem>>, vector<1x2x32xbf16>,
    %c1_i32 = arith.constant 1 : i32
    %36 = arith.index_cast %c1_i32 : i32 to index
    %c0_14 = arith.constant 0 : index
    %c0_15 = arith.constant 0 : index
    %37 = vector.load %arg2[%36, %c0_14, %c0_15] : memref<8x2x128xbf16, #tpu.memory_space<vmem>>, vector<1x2x128xbf16>
    %38 = vector.shape_cast %37 : vector<1x2x128xbf16> to vector<2x128xbf16>
    %39 = arith.extf %38 : vector<2x128xbf16> to vector<2x128xf32>
    %40 = arith.truncf %30 : vector<2x32xf32> to vector<2x32xbf16>
    %cst_16 = arith.constant dense<0.000000e+00> : vector<2x128xf32>
    %41 = tpu.matmul %40, %3, %cst_16 {dimension_numbers = #tpu.dot_dimension_numbers<[1], [0], [0], [1], [0, 0, 1, 1], [], []>} : vector<2x32xbf16>, vector<32x128xbf16>, vector<2x128xf32> -> vector<2x128xf32>
    %42 = arith.addf %39, %41 : vector<2x128xf32>
    %43 = vector.extract_strided_slice %42 {offsets = [0, 0], sizes = [2, 96], strides = [1, 1]} : vector<2x128xf32> to vector<2x96xf32>
    %cst_17 = arith.constant 5.000000e-01 : f32
    %44 = vector.broadcast %cst_17 : f32 to vector<2x96xf32>
    %45 = arith.mulf %44, %43 : vector<2x96xf32>
    %46 = math.tanh %45 : vector<2x96xf32>
    %cst_18 = arith.constant 5.000000e-01 : f32
    %47 = vector.broadcast %cst_18 : f32 to vector<2x96xf32>
    %48 = arith.mulf %47, %46 : vector<2x96xf32>
    %cst_19 = arith.constant 5.000000e-01 : f32
    %49 = vector.broadcast %cst_19 : f32 to vector<2x96xf32>
    %50 = arith.addf %48, %49 : vector<2x96xf32>
    %51 = vector.extract_strided_slice %42 {offsets = [0, 96], sizes = [2, 32], strides = [1, 1]} : vector<2x128xf32> to vector<2x32xf32>
    %52 = math.tanh %51 : vector<2x32xf32>
    %53 = vector.extract_strided_slice %50 {offsets = [0, 0], sizes = [2, 32], strides = [1, 1]} : vector<2x96xf32> to vector<2x32xf32>
    %54 = vector.extract_strided_slice %50 {offsets = [0, 32], sizes = [2, 32], strides = [1, 1]} : vector<2x96xf32> to vector<2x32xf32>
    %55 = vector.extract_strided_slice %50 {offsets = [0, 64], sizes = [2, 32], strides = [1, 1]} : vector<2x96xf32> to vector<2x32xf32>
    %56 = arith.mulf %54, %28 : vector<2x32xf32>
    %57 = arith.mulf %53, %52 : vector<2x32xf32>
    %58 = arith.addf %56, %57 : vector<2x32xf32>
    %59 = math.tanh %58 : vector<2x32xf32>
    %60 = arith.mulf %55, %59 : vector<2x32xf32>
    %61 = arith.truncf %60 : vector<2x32xf32> to vector<2x32xbf16>
    %62 = arith.index_cast %c1_i32 : i32 to index
    %c0_20 = arith.constant 0 : index
    %c0_21 = arith.constant 0 : index
    %63 = vector.load %arg6[%62, %c0_20, %c0_21] : memref<8x2x32xbf16, #tpu.memory_space<vmem>>, vector<1x2x32xbf16>
    %64 = vector.shape_cast %63 : vector<1x2x32xbf16> to vector<2x32xbf16>
    %65 = vector.shape_cast %61 : vector<2x32xbf16> to vector<1x2x32xbf16>
    tpu.vector_store %arg6[%62, %c0_20, %c0_21], %65 {strides = array<i32>} : memref<8x2x32xbf16, #tpu.memory_space<vmem>>, vector<1x2x32xbf16>,
    %c2_i32 = arith.constant 2 : i32
    %66 = arith.index_cast %c2_i32 : i32 to index
    %c0_22 = arith.constant 0 : index
    %c0_23 = arith.constant 0 : index
    %67 = vector.load %arg2[%66, %c0_22, %c0_23] : memref<8x2x128xbf16, #tpu.memory_space<vmem>>, vector<1x2x128xbf16>
    %68 = vector.shape_cast %67 : vector<1x2x128xbf16> to vector<2x128xbf16>
    %69 = arith.extf %68 : vector<2x128xbf16> to vector<2x128xf32>
    %70 = arith.truncf %60 : vector<2x32xf32> to vector<2x32xbf16>
    %cst_24 = arith.constant dense<0.000000e+00> : vector<2x128xf32>
    %71 = tpu.matmul %70, %3, %cst_24 {dimension_numbers = #tpu.dot_dimension_numbers<[1], [0], [0], [1], [0, 0, 1, 1], [], []>} : vector<2x32xbf16>, vector<32x128xbf16>, vector<2x128xf32> -> vector<2x128xf32>
    %72 = arith.addf %69, %71 : vector<2x128xf32>
    %73 = vector.extract_strided_slice %72 {offsets = [0, 0], sizes = [2, 96], strides = [1, 1]} : vector<2x128xf32> to vector<2x96xf32>
    %cst_25 = arith.constant 5.000000e-01 : f32
    %74 = vector.broadcast %cst_25 : f32 to vector<2x96xf32>
    %75 = arith.mulf %74, %73 : vector<2x96xf32>
    %76 = math.tanh %75 : vector<2x96xf32>
    %cst_26 = arith.constant 5.000000e-01 : f32
    %77 = vector.broadcast %cst_26 : f32 to vector<2x96xf32>
    %78 = arith.mulf %77, %76 : vector<2x96xf32>
    %cst_27 = arith.constant 5.000000e-01 : f32
    %79 = vector.broadcast %cst_27 : f32 to vector<2x96xf32>
    %80 = arith.addf %78, %79 : vector<2x96xf32>
    %81 = vector.extract_strided_slice %72 {offsets = [0, 96], sizes = [2, 32], strides = [1, 1]} : vector<2x128xf32> to vector<2x32xf32>
    %82 = math.tanh %81 : vector<2x32xf32>
    %83 = vector.extract_strided_slice %80 {offsets = [0, 0], sizes = [2, 32], strides = [1, 1]} : vector<2x96xf32> to vector<2x32xf32>
    %84 = vector.extract_strided_slice %80 {offsets = [0, 32], sizes = [2, 32], strides = [1, 1]} : vector<2x96xf32> to vector<2x32xf32>
    %85 = vector.extract_strided_slice %80 {offsets = [0, 64], sizes = [2, 32], strides = [1, 1]} : vector<2x96xf32> to vector<2x32xf32>
    %86 = arith.mulf %84, %58 : vector<2x32xf32>
    %87 = arith.mulf %83, %82 : vector<2x32xf32>
    %88 = arith.addf %86, %87 : vector<2x32xf32>
    %89 = math.tanh %88 : vector<2x32xf32>
    %90 = arith.mulf %85, %89 : vector<2x32xf32>
    %91 = arith.truncf %90 : vector<2x32xf32> to vector<2x32xbf16>
    %92 = arith.index_cast %c2_i32 : i32 to index
    %c0_28 = arith.constant 0 : index
    %c0_29 = arith.constant 0 : index
    %93 = vector.load %arg6[%92, %c0_28, %c0_29] : memref<8x2x32xbf16, #tpu.memory_space<vmem>>, vector<1x2x32xbf16>
    %94 = vector.shape_cast %93 : vector<1x2x32xbf16> to vector<2x32xbf16>
    %95 = vector.shape_cast %91 : vector<2x32xbf16> to vector<1x2x32xbf16>
    tpu.vector_store %arg6[%92, %c0_28, %c0_29], %95 {strides = array<i32>} : memref<8x2x32xbf16, #tpu.memory_space<vmem>>, vector<1x2x32xbf16>,
    %c3_i32 = arith.constant 3 : i32
    %96 = arith.index_cast %c3_i32 : i32 to index
    %c0_30 = arith.constant 0 : index
    %c0_31 = arith.constant 0 : index
    %97 = vector.load %arg2[%96, %c0_30, %c0_31] : memref<8x2x128xbf16, #tpu.memory_space<vmem>>, vector<1x2x128xbf16>
    %98 = vector.shape_cast %97 : vector<1x2x128xbf16> to vector<2x128xbf16>
    %99 = arith.extf %98 : vector<2x128xbf16> to vector<2x128xf32>
    %100 = arith.truncf %90 : vector<2x32xf32> to vector<2x32xbf16>
    %cst_32 = arith.constant dense<0.000000e+00> : vector<2x128xf32>
    %101 = tpu.matmul %100, %3, %cst_32 {dimension_numbers = #tpu.dot_dimension_numbers<[1], [0], [0], [1], [0, 0, 1, 1], [], []>} : vector<2x32xbf16>, vector<32x128xbf16>, vector<2x128xf32> -> vector<2x128xf32>
    %102 = arith.addf %99, %101 : vector<2x128xf32>
    %103 = vector.extract_strided_slice %102 {offsets = [0, 0], sizes = [2, 96], strides = [1, 1]} : vector<2x128xf32> to vector<2x96xf32>
    %cst_33 = arith.constant 5.000000e-01 : f32
    %104 = vector.broadcast %cst_33 : f32 to vector<2x96xf32>
    %105 = arith.mulf %104, %103 : vector<2x96xf32>
    %106 = math.tanh %105 : vector<2x96xf32>
    %cst_34 = arith.constant 5.000000e-01 : f32
    %107 = vector.broadcast %cst_34 : f32 to vector<2x96xf32>
    %108 = arith.mulf %107, %106 : vector<2x96xf32>
    %cst_35 = arith.constant 5.000000e-01 : f32
    %109 = vector.broadcast %cst_35 : f32 to vector<2x96xf32>
    %110 = arith.addf %108, %109 : vector<2x96xf32>
    %111 = vector.extract_strided_slice %102 {offsets = [0, 96], sizes = [2, 32], strides = [1, 1]} : vector<2x128xf32> to vector<2x32xf32>
    %112 = math.tanh %111 : vector<2x32xf32>
    %113 = vector.extract_strided_slice %110 {offsets = [0, 0], sizes = [2, 32], strides = [1, 1]} : vector<2x96xf32> to vector<2x32xf32>
    %114 = vector.extract_strided_slice %110 {offsets = [0, 32], sizes = [2, 32], strides = [1, 1]} : vector<2x96xf32> to vector<2x32xf32>
    %115 = vector.extract_strided_slice %110 {offsets = [0, 64], sizes = [2, 32], strides = [1, 1]} : vector<2x96xf32> to vector<2x32xf32>
    %116 = arith.mulf %114, %88 : vector<2x32xf32>
    %117 = arith.mulf %113, %112 : vector<2x32xf32>
    %118 = arith.addf %116, %117 : vector<2x32xf32>
    %119 = math.tanh %118 : vector<2x32xf32>
    %120 = arith.mulf %115, %119 : vector<2x32xf32>
    %121 = arith.truncf %120 : vector<2x32xf32> to vector<2x32xbf16>
    %122 = arith.index_cast %c3_i32 : i32 to index
    %c0_36 = arith.constant 0 : index
    %c0_37 = arith.constant 0 : index
    %123 = vector.load %arg6[%122, %c0_36, %c0_37] : memref<8x2x32xbf16, #tpu.memory_space<vmem>>, vector<1x2x32xbf16>
    %124 = vector.shape_cast %123 : vector<1x2x32xbf16> to vector<2x32xbf16>
    %125 = vector.shape_cast %121 : vector<2x32xbf16> to vector<1x2x32xbf16>
    tpu.vector_store %arg6[%122, %c0_36, %c0_37], %125 {strides = array<i32>} : memref<8x2x32xbf16, #tpu.memory_space<vmem>>, vector<1x2x32xbf16>,
    %c4_i32 = arith.constant 4 : i32
    %126 = arith.index_cast %c4_i32 : i32 to index
    %c0_38 = arith.constant 0 : index
    %c0_39 = arith.constant 0 : index
    %127 = vector.load %arg2[%126, %c0_38, %c0_39] : memref<8x2x128xbf16, #tpu.memory_space<vmem>>, vector<1x2x128xbf16>
    %128 = vector.shape_cast %127 : vector<1x2x128xbf16> to vector<2x128xbf16>
    %129 = arith.extf %128 : vector<2x128xbf16> to vector<2x128xf32>
    %130 = arith.truncf %120 : vector<2x32xf32> to vector<2x32xbf16>
    %cst_40 = arith.constant dense<0.000000e+00> : vector<2x128xf32>
    %131 = tpu.matmul %130, %3, %cst_40 {dimension_numbers = #tpu.dot_dimension_numbers<[1], [0], [0], [1], [0, 0, 1, 1], [], []>} : vector<2x32xbf16>, vector<32x128xbf16>, vector<2x128xf32> -> vector<2x128xf32>
    %132 = arith.addf %129, %131 : vector<2x128xf32>
    %133 = vector.extract_strided_slice %132 {offsets = [0, 0], sizes = [2, 96], strides = [1, 1]} : vector<2x128xf32> to vector<2x96xf32>
    %cst_41 = arith.constant 5.000000e-01 : f32
    %134 = vector.broadcast %cst_41 : f32 to vector<2x96xf32>
    %135 = arith.mulf %134, %133 : vector<2x96xf32>
    %136 = math.tanh %135 : vector<2x96xf32>
    %cst_42 = arith.constant 5.000000e-01 : f32
    %137 = vector.broadcast %cst_42 : f32 to vector<2x96xf32>
    %138 = arith.mulf %137, %136 : vector<2x96xf32>
    %cst_43 = arith.constant 5.000000e-01 : f32
    %139 = vector.broadcast %cst_43 : f32 to vector<2x96xf32>
    %140 = arith.addf %138, %139 : vector<2x96xf32>
    %141 = vector.extract_strided_slice %132 {offsets = [0, 96], sizes = [2, 32], strides = [1, 1]} : vector<2x128xf32> to vector<2x32xf32>
    %142 = math.tanh %141 : vector<2x32xf32>
    %143 = vector.extract_strided_slice %140 {offsets = [0, 0], sizes = [2, 32], strides = [1, 1]} : vector<2x96xf32> to vector<2x32xf32>
    %144 = vector.extract_strided_slice %140 {offsets = [0, 32], sizes = [2, 32], strides = [1, 1]} : vector<2x96xf32> to vector<2x32xf32>
    %145 = vector.extract_strided_slice %140 {offsets = [0, 64], sizes = [2, 32], strides = [1, 1]} : vector<2x96xf32> to vector<2x32xf32>
    %146 = arith.mulf %144, %118 : vector<2x32xf32>
    %147 = arith.mulf %143, %142 : vector<2x32xf32>
    %148 = arith.addf %146, %147 : vector<2x32xf32>
    %149 = math.tanh %148 : vector<2x32xf32>
    %150 = arith.mulf %145, %149 : vector<2x32xf32>
    %151 = arith.truncf %150 : vector<2x32xf32> to vector<2x32xbf16>
    %152 = arith.index_cast %c4_i32 : i32 to index
    %c0_44 = arith.constant 0 : index
    %c0_45 = arith.constant 0 : index
    %153 = vector.load %arg6[%152, %c0_44, %c0_45] : memref<8x2x32xbf16, #tpu.memory_space<vmem>>, vector<1x2x32xbf16>
    %154 = vector.shape_cast %153 : vector<1x2x32xbf16> to vector<2x32xbf16>
    %155 = vector.shape_cast %151 : vector<2x32xbf16> to vector<1x2x32xbf16>
    tpu.vector_store %arg6[%152, %c0_44, %c0_45], %155 {strides = array<i32>} : memref<8x2x32xbf16, #tpu.memory_space<vmem>>, vector<1x2x32xbf16>,
    %c5_i32 = arith.constant 5 : i32
    %156 = arith.index_cast %c5_i32 : i32 to index
    %c0_46 = arith.constant 0 : index
    %c0_47 = arith.constant 0 : index
    %157 = vector.load %arg2[%156, %c0_46, %c0_47] : memref<8x2x128xbf16, #tpu.memory_space<vmem>>, vector<1x2x128xbf16>
    %158 = vector.shape_cast %157 : vector<1x2x128xbf16> to vector<2x128xbf16>
    %159 = arith.extf %158 : vector<2x128xbf16> to vector<2x128xf32>
    %160 = arith.truncf %150 : vector<2x32xf32> to vector<2x32xbf16>
    %cst_48 = arith.constant dense<0.000000e+00> : vector<2x128xf32>
    %161 = tpu.matmul %160, %3, %cst_48 {dimension_numbers = #tpu.dot_dimension_numbers<[1], [0], [0], [1], [0, 0, 1, 1], [], []>} : vector<2x32xbf16>, vector<32x128xbf16>, vector<2x128xf32> -> vector<2x128xf32>
    %162 = arith.addf %159, %161 : vector<2x128xf32>
    %163 = vector.extract_strided_slice %162 {offsets = [0, 0], sizes = [2, 96], strides = [1, 1]} : vector<2x128xf32> to vector<2x96xf32>
    %cst_49 = arith.constant 5.000000e-01 : f32
    %164 = vector.broadcast %cst_49 : f32 to vector<2x96xf32>
    %165 = arith.mulf %164, %163 : vector<2x96xf32>
    %166 = math.tanh %165 : vector<2x96xf32>
    %cst_50 = arith.constant 5.000000e-01 : f32
    %167 = vector.broadcast %cst_50 : f32 to vector<2x96xf32>
    %168 = arith.mulf %167, %166 : vector<2x96xf32>
    %cst_51 = arith.constant 5.000000e-01 : f32
    %169 = vector.broadcast %cst_51 : f32 to vector<2x96xf32>
    %170 = arith.addf %168, %169 : vector<2x96xf32>
    %171 = vector.extract_strided_slice %162 {offsets = [0, 96], sizes = [2, 32], strides = [1, 1]} : vector<2x128xf32> to vector<2x32xf32>
    %172 = math.tanh %171 : vector<2x32xf32>
    %173 = vector.extract_strided_slice %170 {offsets = [0, 0], sizes = [2, 32], strides = [1, 1]} : vector<2x96xf32> to vector<2x32xf32>
    %174 = vector.extract_strided_slice %170 {offsets = [0, 32], sizes = [2, 32], strides = [1, 1]} : vector<2x96xf32> to vector<2x32xf32>
    %175 = vector.extract_strided_slice %170 {offsets = [0, 64], sizes = [2, 32], strides = [1, 1]} : vector<2x96xf32> to vector<2x32xf32>
    %176 = arith.mulf %174, %148 : vector<2x32xf32>
    %177 = arith.mulf %173, %172 : vector<2x32xf32>
    %178 = arith.addf %176, %177 : vector<2x32xf32>
    %179 = math.tanh %178 : vector<2x32xf32>
    %180 = arith.mulf %175, %179 : vector<2x32xf32>
    %181 = arith.truncf %180 : vector<2x32xf32> to vector<2x32xbf16>
    %182 = arith.index_cast %c5_i32 : i32 to index
    %c0_52 = arith.constant 0 : index
    %c0_53 = arith.constant 0 : index
    %183 = vector.load %arg6[%182, %c0_52, %c0_53] : memref<8x2x32xbf16, #tpu.memory_space<vmem>>, vector<1x2x32xbf16>
    %184 = vector.shape_cast %183 : vector<1x2x32xbf16> to vector<2x32xbf16>
    %185 = vector.shape_cast %181 : vector<2x32xbf16> to vector<1x2x32xbf16>
    tpu.vector_store %arg6[%182, %c0_52, %c0_53], %185 {strides = array<i32>} : memref<8x2x32xbf16, #tpu.memory_space<vmem>>, vector<1x2x32xbf16>,
    %c6_i32 = arith.constant 6 : i32
    %186 = arith.index_cast %c6_i32 : i32 to index
    %c0_54 = arith.constant 0 : index
    %c0_55 = arith.constant 0 : index
    %187 = vector.load %arg2[%186, %c0_54, %c0_55] : memref<8x2x128xbf16, #tpu.memory_space<vmem>>, vector<1x2x128xbf16>
    %188 = vector.shape_cast %187 : vector<1x2x128xbf16> to vector<2x128xbf16>
    %189 = arith.extf %188 : vector<2x128xbf16> to vector<2x128xf32>
    %190 = arith.truncf %180 : vector<2x32xf32> to vector<2x32xbf16>
    %cst_56 = arith.constant dense<0.000000e+00> : vector<2x128xf32>
    %191 = tpu.matmul %190, %3, %cst_56 {dimension_numbers = #tpu.dot_dimension_numbers<[1], [0], [0], [1], [0, 0, 1, 1], [], []>} : vector<2x32xbf16>, vector<32x128xbf16>, vector<2x128xf32> -> vector<2x128xf32>
    %192 = arith.addf %189, %191 : vector<2x128xf32>
    %193 = vector.extract_strided_slice %192 {offsets = [0, 0], sizes = [2, 96], strides = [1, 1]} : vector<2x128xf32> to vector<2x96xf32>
    %cst_57 = arith.constant 5.000000e-01 : f32
    %194 = vector.broadcast %cst_57 : f32 to vector<2x96xf32>
    %195 = arith.mulf %194, %193 : vector<2x96xf32>
    %196 = math.tanh %195 : vector<2x96xf32>
    %cst_58 = arith.constant 5.000000e-01 : f32
    %197 = vector.broadcast %cst_58 : f32 to vector<2x96xf32>
    %198 = arith.mulf %197, %196 : vector<2x96xf32>
    %cst_59 = arith.constant 5.000000e-01 : f32
    %199 = vector.broadcast %cst_59 : f32 to vector<2x96xf32>
    %200 = arith.addf %198, %199 : vector<2x96xf32>
    %201 = vector.extract_strided_slice %192 {offsets = [0, 96], sizes = [2, 32], strides = [1, 1]} : vector<2x128xf32> to vector<2x32xf32>
    %202 = math.tanh %201 : vector<2x32xf32>
    %203 = vector.extract_strided_slice %200 {offsets = [0, 0], sizes = [2, 32], strides = [1, 1]} : vector<2x96xf32> to vector<2x32xf32>
    %204 = vector.extract_strided_slice %200 {offsets = [0, 32], sizes = [2, 32], strides = [1, 1]} : vector<2x96xf32> to vector<2x32xf32>
    %205 = vector.extract_strided_slice %200 {offsets = [0, 64], sizes = [2, 32], strides = [1, 1]} : vector<2x96xf32> to vector<2x32xf32>
    %206 = arith.mulf %204, %178 : vector<2x32xf32>
    %207 = arith.mulf %203, %202 : vector<2x32xf32>
    %208 = arith.addf %206, %207 : vector<2x32xf32>
    %209 = math.tanh %208 : vector<2x32xf32>
    %210 = arith.mulf %205, %209 : vector<2x32xf32>
    %211 = arith.truncf %210 : vector<2x32xf32> to vector<2x32xbf16>
    %212 = arith.index_cast %c6_i32 : i32 to index
    %c0_60 = arith.constant 0 : index
    %c0_61 = arith.constant 0 : index
    %213 = vector.load %arg6[%212, %c0_60, %c0_61] : memref<8x2x32xbf16, #tpu.memory_space<vmem>>, vector<1x2x32xbf16>
    %214 = vector.shape_cast %213 : vector<1x2x32xbf16> to vector<2x32xbf16>
    %215 = vector.shape_cast %211 : vector<2x32xbf16> to vector<1x2x32xbf16>
    tpu.vector_store %arg6[%212, %c0_60, %c0_61], %215 {strides = array<i32>} : memref<8x2x32xbf16, #tpu.memory_space<vmem>>, vector<1x2x32xbf16>,
    %c7_i32 = arith.constant 7 : i32
    %216 = arith.index_cast %c7_i32 : i32 to index
    %c0_62 = arith.constant 0 : index
    %c0_63 = arith.constant 0 : index
    %217 = vector.load %arg2[%216, %c0_62, %c0_63] : memref<8x2x128xbf16, #tpu.memory_space<vmem>>, vector<1x2x128xbf16>
    %218 = vector.shape_cast %217 : vector<1x2x128xbf16> to vector<2x128xbf16>
    %219 = arith.extf %218 : vector<2x128xbf16> to vector<2x128xf32>
    %220 = arith.truncf %210 : vector<2x32xf32> to vector<2x32xbf16>
    %cst_64 = arith.constant dense<0.000000e+00> : vector<2x128xf32>
    %221 = tpu.matmul %220, %3, %cst_64 {dimension_numbers = #tpu.dot_dimension_numbers<[1], [0], [0], [1], [0, 0, 1, 1], [], []>} : vector<2x32xbf16>, vector<32x128xbf16>, vector<2x128xf32> -> vector<2x128xf32>
    %222 = arith.addf %219, %221 : vector<2x128xf32>
    %223 = vector.extract_strided_slice %222 {offsets = [0, 0], sizes = [2, 96], strides = [1, 1]} : vector<2x128xf32> to vector<2x96xf32>
    %cst_65 = arith.constant 5.000000e-01 : f32
    %224 = vector.broadcast %cst_65 : f32 to vector<2x96xf32>
    %225 = arith.mulf %224, %223 : vector<2x96xf32>
    %226 = math.tanh %225 : vector<2x96xf32>
    %cst_66 = arith.constant 5.000000e-01 : f32
    %227 = vector.broadcast %cst_66 : f32 to vector<2x96xf32>
    %228 = arith.mulf %227, %226 : vector<2x96xf32>
    %cst_67 = arith.constant 5.000000e-01 : f32
    %229 = vector.broadcast %cst_67 : f32 to vector<2x96xf32>
    %230 = arith.addf %228, %229 : vector<2x96xf32>
    %231 = vector.extract_strided_slice %222 {offsets = [0, 96], sizes = [2, 32], strides = [1, 1]} : vector<2x128xf32> to vector<2x32xf32>
    %232 = math.tanh %231 : vector<2x32xf32>
    %233 = vector.extract_strided_slice %230 {offsets = [0, 0], sizes = [2, 32], strides = [1, 1]} : vector<2x96xf32> to vector<2x32xf32>
    %234 = vector.extract_strided_slice %230 {offsets = [0, 32], sizes = [2, 32], strides = [1, 1]} : vector<2x96xf32> to vector<2x32xf32>
    %235 = vector.extract_strided_slice %230 {offsets = [0, 64], sizes = [2, 32], strides = [1, 1]} : vector<2x96xf32> to vector<2x32xf32>
    %236 = arith.mulf %234, %208 : vector<2x32xf32>
    %237 = arith.mulf %233, %232 : vector<2x32xf32>
    %238 = arith.addf %236, %237 : vector<2x32xf32>
    %239 = math.tanh %238 : vector<2x32xf32>
    %240 = arith.mulf %235, %239 : vector<2x32xf32>
    %241 = arith.truncf %240 : vector<2x32xf32> to vector<2x32xbf16>
    %242 = arith.index_cast %c7_i32 : i32 to index
    %c0_68 = arith.constant 0 : index
    %c0_69 = arith.constant 0 : index
    %243 = vector.load %arg6[%242, %c0_68, %c0_69] : memref<8x2x32xbf16, #tpu.memory_space<vmem>>, vector<1x2x32xbf16>
    %244 = vector.shape_cast %243 : vector<1x2x32xbf16> to vector<2x32xbf16>
    %245 = vector.shape_cast %241 : vector<2x32xbf16> to vector<1x2x32xbf16>
    tpu.vector_store %arg6[%242, %c0_68, %c0_69], %245 {strides = array<i32>} : memref<8x2x32xbf16, #tpu.memory_space<vmem>>, vector<1x2x32xbf16>,
    %c8_i32 = arith.constant 8 : i32
    %c0_70 = arith.constant 0 : index
    %c0_71 = arith.constant 0 : index
    %246 = vector.load %arg9[%c0_70, %c0_71] : memref<2x32xf32, #tpu.memory_space<vmem>>, vector<2x32xf32>
    tpu.vector_store %arg9[%c0_70, %c0_71], %240 {strides = array<i32>} : memref<2x32xf32, #tpu.memory_space<vmem>>, vector<2x32xf32>,
    %c0_72 = arith.constant 0 : index
    %c0_73 = arith.constant 0 : index
    %247 = vector.load %arg10[%c0_72, %c0_73] : memref<2x32xf32, #tpu.memory_space<vmem>>, vector<2x32xf32>
    tpu.vector_store %arg10[%c0_72, %c0_73], %238 {strides = array<i32>} : memref<2x32xf32, #tpu.memory_space<vmem>>, vector<2x32xf32>,
    %c0_i32_74 = arith.constant 0 : i32
    %248 = arith.cmpi eq, %arg1, %c0_i32_74 : i32
    %249 = arith.extui %248 : i1 to i32
    %c0_i32_75 = arith.constant 0 : i32
    %250 = arith.cmpi ne, %249, %c0_i32_75 : i32
    scf.if %250 {
      %c0_76 = arith.constant 0 : index
      %c0_77 = arith.constant 0 : index
      %251 = vector.load %arg9[%c0_76, %c0_77] : memref<2x32xf32, #tpu.memory_space<vmem>>, vector<2x32xf32>
      %c0_78 = arith.constant 0 : index
      %c0_79 = arith.constant 0 : index
      %252 = vector.load %arg7[%c0_78, %c0_79] : memref<2x32xf32, #tpu.memory_space<vmem>>, vector<2x32xf32>
      tpu.vector_store %arg7[%c0_78, %c0_79], %251 {strides = array<i32>} : memref<2x32xf32, #tpu.memory_space<vmem>>, vector<2x32xf32>,
      %c0_80 = arith.constant 0 : index
      %c0_81 = arith.constant 0 : index
      %253 = vector.load %arg10[%c0_80, %c0_81] : memref<2x32xf32, #tpu.memory_space<vmem>>, vector<2x32xf32>
      %c0_82 = arith.constant 0 : index
      %c0_83 = arith.constant 0 : index
      %254 = vector.load %arg8[%c0_82, %c0_83] : memref<2x32xf32, #tpu.memory_space<vmem>>, vector<2x32xf32>
      tpu.vector_store %arg8[%c0_82, %c0_83], %253 {strides = array<i32>} : memref<2x32xf32, #tpu.memory_space<vmem>>, vector<2x32xf32>,
    } else {
    }
    return
  }
  func.func @transform_0(%arg0: i32, %arg1: i32) -> (i32, i32, i32) {
    %c0_i32 = arith.constant 0 : i32
    %c0_i32_0 = arith.constant 0 : i32
    return %arg1, %arg0, %c0_i32 : i32, i32, i32
  }
  func.func @transform_1(%arg0: i32, %arg1: i32) -> (i32, i32) {
    %c0_i32 = arith.constant 0 : i32
    %c0_i32_0 = arith.constant 0 : i32
    %c0_i32_1 = arith.constant 0 : i32
    return %c0_i32, %c0_i32_0 : i32, i32
  }
  func.func @transform_2(%arg0: i32, %arg1: i32) -> (i32, i32) {
    %c0_i32 = arith.constant 0 : i32
    %c0_i32_0 = arith.constant 0 : i32
    return %arg0, %c0_i32 : i32, i32
  }
  func.func @transform_3(%arg0: i32, %arg1: i32) -> (i32, i32) {
    %c0_i32 = arith.constant 0 : i32
    %c0_i32_0 = arith.constant 0 : i32
    return %arg0, %c0_i32 : i32, i32
  }
  func.func @transform_4(%arg0: i32, %arg1: i32) -> (i32, i32, i32) {
    %c0_i32 = arith.constant 0 : i32
    %c0_i32_0 = arith.constant 0 : i32
    return %arg1, %arg0, %c0_i32 : i32, i32, i32
  }
  func.func @transform_5(%arg0: i32, %arg1: i32) -> (i32, i32) {
    %c0_i32 = arith.constant 0 : i32
    %c0_i32_0 = arith.constant 0 : i32
    return %arg0, %c0_i32 : i32, i32
  }
  func.func @transform_6(%arg0: i32, %arg1: i32) -> (i32, i32) {
    %c0_i32 = arith.constant 0 : i32
    %c0_i32_0 = arith.constant 0 : i32
    return %arg0, %c0_i32 : i32, i32
  }
}

</mosaic_0001>

<llo_original>
// kernel: tpu_custom_call.1
$region0: #{tpu_custom_call.1}
  #allocation0 [shape = 'u32[]', space=smem, size = 0x4, offset = 0x4, fixed_abs, tag = 'smem constant byte address 0x4 - core index']
  #allocation1 [shape = 'u32[144,128]{1,0:T(1,128)}', space=vmem, size = 0x12000, scoped, tag = 'internal scratch']
  #allocation2 [shape = 'f32[2,32]{1,0:T(2,128)}', space=vmem, size = 0x400, scoped, tag = 'scratch operand']
  #allocation3 [shape = 'f32[2,32]{1,0:T(2,128)}', space=vmem, size = 0x400, scoped, tag = 'scratch operand']
  %s0 = inlined_call_operand.hbm [shape: bf16[8,2,128], index: 0, kind: input, shape index: {}]
  %s1 = inlined_call_operand.hbm [shape: bf16[32,128], index: 1, kind: input, shape index: {}]
  %s2 = inlined_call_operand.vmem [shape: f32[2,32], index: 2, kind: input, shape index: {}]
  %s3 = inlined_call_operand.vmem [shape: f32[2,32], index: 3, kind: input, shape index: {}]
  %s4 = inlined_call_operand.hbm [shape: bf16[8,2,32], index: 4, kind: output, shape index: {0}]
  %s5 = inlined_call_operand.hbm [shape: f32[2,32], index: 5, kind: output, shape index: {1}]
  %s6 = inlined_call_operand.hbm [shape: f32[2,32], index: 6, kind: output, shape index: {2}]
  %7 = xla_tuple %s4, %s5, %s6
  %s8 = sld [smem:[#allocation0]]
  $region58: #{tpu_custom_call.1} parent=0
    _
  %s10 = ssub.s32 1, %s8
  %s11 = scalar_select 0, %s10, %s8
  $region1: #{tpu_custom_call.1} parent=0
    #allocation4 [shape = 'u8[4096]{0}', space=vmem, size = 0x1000, scoped, tag = 'input window, operand 0, single buffered']
    #allocation5 [shape = 's32[1]{0}', space=sflag, size = 0x4, scoped, tag = 'scoped memory for tpu_custom_call.1']
    #allocation6 [shape = 's32[1]{0}', space=sflag, size = 0x4, scoped, tag = 'scoped memory for tpu_custom_call.1']
    #allocation7 [shape = 'u8[8192]{0}', space=vmem, size = 0x2000, scoped, tag = 'input window, operand 1, single buffered']
    #allocation8 [shape = 's32[1]{0}', space=sflag, size = 0x4, scoped, tag = 'scoped memory for tpu_custom_call.1']
    #allocation9 [shape = 'u8[4096]{0}', space=vmem, size = 0x1000, scoped, tag = 'output window, operand 0, single buffered']
    #allocation10 [shape = 'u8[1024]{0}', space=vmem, size = 0x400, scoped, tag = 'output window, operand 1, single buffered']
    #allocation11 [shape = 's32[1]{0}', space=sflag, size = 0x4, scoped, tag = 'scoped memory for tpu_custom_call.1']
    #allocation12 [shape = 'u8[1024]{0}', space=vmem, size = 0x400, scoped, tag = 'output window, operand 2, single buffered']
    %12 = vsyncpa [#allocation5], 0
    %13 = vsyncpa [#allocation8], 0
    %14 = vsyncpa [#allocation6], 0
    %15 = vsyncpa [#allocation11], 0
    // Predicated region
    $region2: #{tpu_custom_call.1} parent=1 // pred_check
      _
    $region3: #{tpu_custom_call.1} parent=1 // pred_check_branch
      %17 = sbr.rel (0) target = $region5
    $region4: #{tpu_custom_call.1} parent=1 // pred_region
      %s19 = ssub.s32 128, 128
      %20 = vsyncadd [#allocation5], %s19
      %s21 = sshll.u32 [#allocation4], 4
      %s22 = int_to_ptr.vmem [resolvable:$true] %s21
      %27 = dma.hbm_to_vmem [thread:$0]  %s0, 128, %s22, [#allocation5], 16, 16, 1
    $region5: #{tpu_custom_call.1} parent=1 // pred_fallthru
      _
    // Predicated region
    $region6: #{tpu_custom_call.1} parent=1 // pred_check
      _
    $region7: #{tpu_custom_call.1} parent=1 // pred_check_branch
      %29 = sbr.rel (0) target = $region9
    $region8: #{tpu_custom_call.1} parent=1 // pred_region
      %s31 = ssub.s32 256, 256
      %32 = vsyncadd [#allocation8], %s31
      %s33 = sshll.u32 [#allocation7], 4
      %s34 = int_to_ptr.vmem [resolvable:$true] %s33
      %39 = dma.hbm_to_vmem [thread:$0]  %s1, 256, %s34, [#allocation8], 64, 64, 4
    $region9: #{tpu_custom_call.1} parent=1 // pred_fallthru
      _
    // Predicated region
    $region10: #{tpu_custom_call.1} parent=1 // pred_check
      _
    $region11: #{tpu_custom_call.1} parent=1 // pred_check_branch
      %41 = sbr.rel (0) target = $region13
    $region12: #{tpu_custom_call.1} parent=1 // pred_region
      _
    $region13: #{tpu_custom_call.1} parent=1 // pred_fallthru
      _
    // Predicated region
    $region14: #{tpu_custom_call.1} parent=1 // pred_check
      _
    $region15: #{tpu_custom_call.1} parent=1 // pred_check_branch
      %43 = sbr.rel (0) target = $region17
    $region16: #{tpu_custom_call.1} parent=1 // pred_region
      _
    $region17: #{tpu_custom_call.1} parent=1 // pred_fallthru
      _
    // Predicated region
    $region18: #{tpu_custom_call.1} parent=1 // pred_check
      _
    $region19: #{tpu_custom_call.1} parent=1 // pred_check_branch
      %45 = sbr.rel (0) target = $region21
    $region20: #{tpu_custom_call.1} parent=1 // pred_region
      %46 = dma.done [#allocation5], 128
    $region21: #{tpu_custom_call.1} parent=1 // pred_fallthru
      _
    // Predicated region
    $region22: #{tpu_custom_call.1} parent=1 // pred_check
      _
    $region23: #{tpu_custom_call.1} parent=1 // pred_check_branch
      %48 = sbr.rel (0) target = $region25
    $region24: #{tpu_custom_call.1} parent=1 // pred_region
      %49 = dma.done [#allocation8], 256
    $region25: #{tpu_custom_call.1} parent=1 // pred_fallthru
      _
    %p51 = scmp.eq.s32.totalorder 0, 0
    // Predicated region
    $region26: #{tpu_custom_call.1} parent=1 // pred_check
      %p52 = pneg %p51
    $region27: #{tpu_custom_call.1} parent=1 // pred_check_branch
      %54 = sbr.rel (%p52) target = $region29
    $region28: #{tpu_custom_call.1} parent=1 // pred_region
      %v55 = vld [vmem:[%s2] sm:$0x3]
      %vm56 = vcmask 254976
      %57 = vst.msk [vmem:[#allocation2] sm:$0x3] %vm56, %v55
      %v58 = vld [vmem:[%s3] sm:$0x3]
      %59 = vst.msk [vmem:[#allocation3] sm:$0x3] %vm56, %v58
    $region29: #{tpu_custom_call.1} parent=1 // pred_fallthru
      _
    %v60 = vld [vmem:[#allocation7] sm:$0xf]
    %v61 = vld [vmem:[#allocation7 + $0x4] sm:$0xf]
    %v62 = vld [vmem:[#allocation7 + $0x8] sm:$0xf]
    %v63 = vld [vmem:[#allocation7 + $0xc] sm:$0xf]
    %v64 = vld [vmem:[#allocation2] sm:$0x3]
    %v65 = vld [vmem:[#allocation3] sm:$0x3]
    %v66 = vld [vmem:[#allocation4] sm:$0x1]
    %v67 = vunpack.c.l.bf16 %v66
    %v68 = vpack.c.bf16 %v64, %v64
    %v73 = vunpack.c.l.b16 %v60
    %v74 = vunpack.c.l.b16 %v61
    %v75 = vunpack.c.l.b16 %v62
    %v76 = vunpack.c.l.b16 %v63
    %v77 = vpack.c.b16 %v74, %v73
    %v78 = vpack.c.b16 %v76, %v75
    %vm81 = vcmask 261120
    %v83 = vsel %vm81, %v68, 0
    %85 = vmatprep.subr.bf16.mxu0 0
    %86 = vmatpush1.bf16.msra.mxu0 %v77
    %87 = vmatprep.subr.bf16.mxu0 0
    %88 = vmatpush1.bf16.msra.mxu0 %v78
    %89 = vmatprep.subr.bf16.mxu0 0
    %90 = vmatpush1.bf16.msra.mxu0 0
    %91 = vmatprep.subr.bf16.mxu0 0
    %92 = vmatpush1.bf16.msra.mxu0 0
    %93 = vmatprep.subr.bf16.mxu0 0
    %94 = vmatpush1.bf16.msra.mxu0 0
    %95 = vmatprep.subr.bf16.mxu0 0
    %96 = vmatpush1.bf16.msra.mxu0 0
    %97 = vmatprep.subr.bf16.mxu0 0
    %98 = vmatpush1.bf16.msra.mxu0 0
    %99 = vmatprep.subr.bf16.mxu0 0
    %100 = vmatpush1.bf16.msra.mxu0 0
    %101 = vmatprep.subr.bf16.mxu0 0
    %102 = vmatpush1.bf16.msra.mxu0 0
    %103 = vmatprep.subr.bf16.mxu0 0
    %104 = vmatpush1.bf16.msra.mxu0 0
    %105 = vmatprep.subr.bf16.mxu0 0
    %106 = vmatpush1.bf16.msra.mxu0 0
    %107 = vmatprep.subr.bf16.mxu0 0
    %108 = vmatpush1.bf16.msra.mxu0 0
    %109 = vmatprep.subr.bf16.mxu0 0
    %110 = vmatpush1.bf16.msra.mxu0 0
    %111 = vmatprep.subr.bf16.mxu0 0
    %112 = vmatpush1.bf16.msra.mxu0 0
    %113 = vmatprep.subr.bf16.mxu0 0
    %114 = vmatpush1.bf16.msra.mxu0 0
    %115 = vmatprep.subr.bf16.mxu0 0
    %116 = vmatpush1.bf16.msra.mxu0 0
    %117 = vmatprep.mubr.bf16.mxu0 0
    %118 = vmatmul.mubr.bf16.gmra.mrb[0].mxu0 %v83
    %v119 = vpop.f32.mrb[0].mxu0
    %v120 = vadd.f32 0.0, %v119
    %v121 = vpop.f32.mrb[0].mxu0
    %v122 = vpop.f32.mrb[0].mxu0
    %v123 = vpop.f32.mrb[0].mxu0
    %124 = vdwg.mxu0
    %v125 = vadd.f32 %v67, %v120
    %v126 = vmul.f32 %v125, 0.5
    %v127 = vtanh.pop %v126
    %v128 = vmul.f32 %v127, 0.5
    %v129 = vadd.f32 %v128, 0.5
    %v130 = vtanh.pop %v125
    %v133 = vunpack.c.l.s4 1983009808
    %v134 = vunpack.c.0.s8 %v133
    %v135 = vlaneseq
    %v136 = vshrl.u32 %v135, 7
    %v137 = vsub.s32 %v134, %v136
    %v138 = vrot.slane %v65, %v137
    %139 = vrot.lane.b32.xlu0 %v138, 32
    %v140 = vpop.permute.xlu0 %139
    %v142 = vmul.f32 %v129, %v140
    %144 = vrot.lane.b32.xlu0 %v130, 32
    %v145 = vpop.permute.xlu0 %144
    %v147 = vmul.f32 %v129, %v145
    %149 = vrot.lane.b32.xlu0 %v147, 32
    %v150 = vpop.permute.xlu0 %149
    %v152 = vadd.f32 %v142, %v150
    %v153 = vtanh.pop %v152
    %155 = vrot.lane.b32.xlu0 %v153, 32
    %v156 = vpop.permute.xlu0 %155
    %v158 = vmul.f32 %v129, %v156
    %v159 = vpack.c.bf16 %v158, %v158
    %v162 = vunpack.c.l.s4 1966171168
    %v163 = vunpack.c.0.s8 %v162
    %v164 = vlaneseq
    %v165 = vshrl.u32 %v164, 7
    %v166 = vsub.s32 %v163, %v165
    %v167 = vrot.slane %v159, %v166
    %v169 = vunpack.c.l.s4 1966171168
    %v170 = vunpack.c.0.s8 %v169
    %v171 = vlaneseq
    %v172 = vshrl.u32 %v171, 7
    %v173 = vsub.s32 %v170, %v172
    %v174 = vrot.slane %v167, %v173
    %175 = vrot.lane.b32.xlu0 %v174, 64
    %v176 = vpop.permute.xlu0 %175
    %vm178 = vcmask 253952
    %179 = vst.msk [vmem:[#allocation9] sm:$0x1] %vm178, %v176
    %s180 = scalar_lea.vmem [#allocation4], 1
    %v181 = vld [vmem:[%s180] sm:$0x1]
    %v182 = vunpack.c.l.bf16 %v181
    %183 = vrot.lane.b32.xlu0 %v159, 64
    %v184 = vpop.permute.xlu0 %183
    %v186 = vsel %vm81, %v184, 0
    %188 = vmatprep.subr.bf16.mxu0 0
    %189 = vmatpush1.bf16.msra.mxu0 %v77
    %190 = vmatprep.subr.bf16.mxu0 0
    %191 = vmatpush1.bf16.msra.mxu0 %v78
    %192 = vmatprep.subr.bf16.mxu0 0
    %193 = vmatpush1.bf16.msra.mxu0 0
    %194 = vmatprep.subr.bf16.mxu0 0
    %195 = vmatpush1.bf16.msra.mxu0 0
    %196 = vmatprep.subr.bf16.mxu0 0
    %197 = vmatpush1.bf16.msra.mxu0 0
    %198 = vmatprep.subr.bf16.mxu0 0
    %199 = vmatpush1.bf16.msra.mxu0 0
    %200 = vmatprep.subr.bf16.mxu0 0
    %201 = vmatpush1.bf16.msra.mxu0 0
    %202 = vmatprep.subr.bf16.mxu0 0
    %203 = vmatpush1.bf16.msra.mxu0 0
    %204 = vmatprep.subr.bf16.mxu0 0
    %205 = vmatpush1.bf16.msra.mxu0 0
    %206 = vmatprep.subr.bf16.mxu0 0
    %207 = vmatpush1.bf16.msra.mxu0 0
    %208 = vmatprep.subr.bf16.mxu0 0
    %209 = vmatpush1.bf16.msra.mxu0 0
    %210 = vmatprep.subr.bf16.mxu0 0
    %211 = vmatpush1.bf16.msra.mxu0 0
    %212 = vmatprep.subr.bf16.mxu0 0
    %213 = vmatpush1.bf16.msra.mxu0 0
    %214 = vmatprep.subr.bf16.mxu0 0
    %215 = vmatpush1.bf16.msra.mxu0 0
    %216 = vmatprep.subr.bf16.mxu0 0
    %217 = vmatpush1.bf16.msra.mxu0 0
    %218 = vmatprep.subr.bf16.mxu0 0
    %219 = vmatpush1.bf16.msra.mxu0 0
    %220 = vmatprep.mubr.bf16.mxu0 0
    %221 = vmatmul.mubr.bf16.gmra.mrb[0].mxu0 %v186
    %v222 = vpop.f32.mrb[0].mxu0
    %v223 = vadd.f32 0.0, %v222
    %v224 = vpop.f32.mrb[0].mxu0
    %v225 = vpop.f32.mrb[0].mxu0
    %v226 = vpop.f32.mrb[0].mxu0
    %227 = vdwg.mxu0
    %v228 = vadd.f32 %v182, %v223
    %v229 = vmul.f32 %v228, 0.5
    %v230 = vtanh.pop %v229
    %v231 = vmul.f32 %v230, 0.5
    %v232 = vadd.f32 %v231, 0.5
    %v233 = vtanh.pop %v228
    %v234 = vmul.f32 %v232, %v152
    %236 = vrot.lane.b32.xlu0 %v233, 32
    %v237 = vpop.permute.xlu0 %236
    %v239 = vmul.f32 %v232, %v237
    %241 = vrot.lane.b32.xlu0 %v239, 32
    %v242 = vpop.permute.xlu0 %241
    %v244 = vadd.f32 %v234, %v242
    %v245 = vtanh.pop %v244
    %247 = vrot.lane.b32.xlu0 %v245, 32
    %v248 = vpop.permute.xlu0 %247
    %v250 = vmul.f32 %v232, %v248
    %v251 = vpack.c.bf16 %v250, %v250
    %v254 = vunpack.c.l.s4 1966171168
    %v255 = vunpack.c.0.s8 %v254
    %v256 = vlaneseq
    %v257 = vshrl.u32 %v256, 7
    %v258 = vsub.s32 %v255, %v257
    %v259 = vrot.slane %v251, %v258
    %v261 = vunpack.c.l.s4 1966171168
    %v262 = vunpack.c.0.s8 %v261
    %v263 = vlaneseq
    %v264 = vshrl.u32 %v263, 7
    %v265 = vsub.s32 %v262, %v264
    %v266 = vrot.slane %v259, %v265
    %267 = vrot.lane.b32.xlu0 %v266, 64
    %v268 = vpop.permute.xlu0 %267
    %s270 = scalar_lea.vmem [#allocation9], 1
    %271 = vst.msk [vmem:[%s270] sm:$0x1] %vm178, %v268
    %s272 = scalar_lea.vmem [#allocation4], 2
    %v273 = vld [vmem:[%s272] sm:$0x1]
    %v274 = vunpack.c.l.bf16 %v273
    %275 = vrot.lane.b32.xlu0 %v251, 64
    %v276 = vpop.permute.xlu0 %275
    %v278 = vsel %vm81, %v276, 0
    %280 = vmatprep.subr.bf16.mxu0 0
    %281 = vmatpush1.bf16.msra.mxu0 %v77
    %282 = vmatprep.subr.bf16.mxu0 0
    %283 = vmatpush1.bf16.msra.mxu0 %v78
    %284 = vmatprep.subr.bf16.mxu0 0
    %285 = vmatpush1.bf16.msra.mxu0 0
    %286 = vmatprep.subr.bf16.mxu0 0
    %287 = vmatpush1.bf16.msra.mxu0 0
    %288 = vmatprep.subr.bf16.mxu0 0
    %289 = vmatpush1.bf16.msra.mxu0 0
    %290 = vmatprep.subr.bf16.mxu0 0
    %291 = vmatpush1.bf16.msra.mxu0 0
    %292 = vmatprep.subr.bf16.mxu0 0
    %293 = vmatpush1.bf16.msra.mxu0 0
    %294 = vmatprep.subr.bf16.mxu0 0
    %295 = vmatpush1.bf16.msra.mxu0 0
    %296 = vmatprep.subr.bf16.mxu0 0
    %297 = vmatpush1.bf16.msra.mxu0 0
    %298 = vmatprep.subr.bf16.mxu0 0
    %299 = vmatpush1.bf16.msra.mxu0 0
    %300 = vmatprep.subr.bf16.mxu0 0
    %301 = vmatpush1.bf16.msra.mxu0 0
    %302 = vmatprep.subr.bf16.mxu0 0
    %303 = vmatpush1.bf16.msra.mxu0 0
    %304 = vmatprep.subr.bf16.mxu0 0
    %305 = vmatpush1.bf16.msra.mxu0 0
    %306 = vmatprep.subr.bf16.mxu0 0
    %307 = vmatpush1.bf16.msra.mxu0 0
    %308 = vmatprep.subr.bf16.mxu0 0
    %309 = vmatpush1.bf16.msra.mxu0 0
    %310 = vmatprep.subr.bf16.mxu0 0
    %311 = vmatpush1.bf16.msra.mxu0 0
    %312 = vmatprep.mubr.bf16.mxu0 0
    %313 = vmatmul.mubr.bf16.gmra.mrb[0].mxu0 %v278
    %v314 = vpop.f32.mrb[0].mxu0
    %v315 = vadd.f32 0.0, %v314
    %v316 = vpop.f32.mrb[0].mxu0
    %v317 = vpop.f32.mrb[0].mxu0
    %v318 = vpop.f32.mrb[0].mxu0
    %319 = vdwg.mxu0
    %v320 = vadd.f32 %v274, %v315
    %v321 = vmul.f32 %v320, 0.5
    %v322 = vtanh.pop %v321
    %v323 = vmul.f32 %v322, 0.5
    %v324 = vadd.f32 %v323, 0.5
    %v325 = vtanh.pop %v320
    %v326 = vmul.f32 %v324, %v244
    %328 = vrot.lane.b32.xlu0 %v325, 32
    %v329 = vpop.permute.xlu0 %328
    %v331 = vmul.f32 %v324, %v329
    %333 = vrot.lane.b32.xlu0 %v331, 32
    %v334 = vpop.permute.xlu0 %333
    %v336 = vadd.f32 %v326, %v334
    %v337 = vtanh.pop %v336
    %339 = vrot.lane.b32.xlu0 %v337, 32
    %v340 = vpop.permute.xlu0 %339
    %v342 = vmul.f32 %v324, %v340
    %v343 = vpack.c.bf16 %v342, %v342
    %v346 = vunpack.c.l.s4 1966171168
    %v347 = vunpack.c.0.s8 %v346
    %v348 = vlaneseq
    %v349 = vshrl.u32 %v348, 7
    %v350 = vsub.s32 %v347, %v349
    %v351 = vrot.slane %v343, %v350
    %v353 = vunpack.c.l.s4 1966171168
    %v354 = vunpack.c.0.s8 %v353
    %v355 = vlaneseq
    %v356 = vshrl.u32 %v355, 7
    %v357 = vsub.s32 %v354, %v356
    %v358 = vrot.slane %v351, %v357
    %359 = vrot.lane.b32.xlu0 %v358, 64
    %v360 = vpop.permute.xlu0 %359
    %s362 = scalar_lea.vmem [#allocation9], 2
    %363 = vst.msk [vmem:[%s362] sm:$0x1] %vm178, %v360
    %s364 = scalar_lea.vmem [#allocation4], 3
    %v365 = vld [vmem:[%s364] sm:$0x1]
    %v366 = vunpack.c.l.bf16 %v365
    %367 = vrot.lane.b32.xlu0 %v343, 64
    %v368 = vpop.permute.xlu0 %367
    %v370 = vsel %vm81, %v368, 0
    %372 = vmatprep.subr.bf16.mxu0 0
    %373 = vmatpush1.bf16.msra.mxu0 %v77
    %374 = vmatprep.subr.bf16.mxu0 0
    %375 = vmatpush1.bf16.msra.mxu0 %v78
    %376 = vmatprep.subr.bf16.mxu0 0
    %377 = vmatpush1.bf16.msra.mxu0 0
    %378 = vmatprep.subr.bf16.mxu0 0
    %379 = vmatpush1.bf16.msra.mxu0 0
    %380 = vmatprep.subr.bf16.mxu0 0
    %381 = vmatpush1.bf16.msra.mxu0 0
    %382 = vmatprep.subr.bf16.mxu0 0
    %383 = vmatpush1.bf16.msra.mxu0 0
    %384 = vmatprep.subr.bf16.mxu0 0
    %385 = vmatpush1.bf16.msra.mxu0 0
    %386 = vmatprep.subr.bf16.mxu0 0
    %387 = vmatpush1.bf16.msra.mxu0 0
    %388 = vmatprep.subr.bf16.mxu0 0
    %389 = vmatpush1.bf16.msra.mxu0 0
    %390 = vmatprep.subr.bf16.mxu0 0
    %391 = vmatpush1.bf16.msra.mxu0 0
    %392 = vmatprep.subr.bf16.mxu0 0
    %393 = vmatpush1.bf16.msra.mxu0 0
    %394 = vmatprep.subr.bf16.mxu0 0
    %395 = vmatpush1.bf16.msra.mxu0 0
    %396 = vmatprep.subr.bf16.mxu0 0
    %397 = vmatpush1.bf16.msra.mxu0 0
    %398 = vmatprep.subr.bf16.mxu0 0
    %399 = vmatpush1.bf16.msra.mxu0 0
    %400 = vmatprep.subr.bf16.mxu0 0
    %401 = vmatpush1.bf16.msra.mxu0 0
    %402 = vmatprep.subr.bf16.mxu0 0
    %403 = vmatpush1.bf16.msra.mxu0 0
    %404 = vmatprep.mubr.bf16.mxu0 0
    %405 = vmatmul.mubr.bf16.gmra.mrb[0].mxu0 %v370
    %v406 = vpop.f32.mrb[0].mxu0
    %v407 = vadd.f32 0.0, %v406
    %v408 = vpop.f32.mrb[0].mxu0
    %v409 = vpop.f32.mrb[0].mxu0
    %v410 = vpop.f32.mrb[0].mxu0
    %411 = vdwg.mxu0
    %v412 = vadd.f32 %v366, %v407
    %v413 = vmul.f32 %v412, 0.5
    %v414 = vtanh.pop %v413
    %v415 = vmul.f32 %v414, 0.5
    %v416 = vadd.f32 %v415, 0.5
    %v417 = vtanh.pop %v412
    %v418 = vmul.f32 %v416, %v336
    %420 = vrot.lane.b32.xlu0 %v417, 32
    %v421 = vpop.permute.xlu0 %420
    %v423 = vmul.f32 %v416, %v421
    %425 = vrot.lane.b32.xlu0 %v423, 32
    %v426 = vpop.permute.xlu0 %425
    %v428 = vadd.f32 %v418, %v426
    %v429 = vtanh.pop %v428
    %431 = vrot.lane.b32.xlu0 %v429, 32
    %v432 = vpop.permute.xlu0 %431
    %v434 = vmul.f32 %v416, %v432
    %v435 = vpack.c.bf16 %v434, %v434
    %v438 = vunpack.c.l.s4 1966171168
    %v439 = vunpack.c.0.s8 %v438
    %v440 = vlaneseq
    %v441 = vshrl.u32 %v440, 7
    %v442 = vsub.s32 %v439, %v441
    %v443 = vrot.slane %v435, %v442
    %v445 = vunpack.c.l.s4 1966171168
    %v446 = vunpack.c.0.s8 %v445
    %v447 = vlaneseq
    %v448 = vshrl.u32 %v447, 7
    %v449 = vsub.s32 %v446, %v448
    %v450 = vrot.slane %v443, %v449
    %451 = vrot.lane.b32.xlu0 %v450, 64
    %v452 = vpop.permute.xlu0 %451
    %s454 = scalar_lea.vmem [#allocation9], 3
    %455 = vst.msk [vmem:[%s454] sm:$0x1] %vm178, %v452
    %s456 = scalar_lea.vmem [#allocation4], 4
    %v457 = vld [vmem:[%s456] sm:$0x1]
    %v458 = vunpack.c.l.bf16 %v457
    %459 = vrot.lane.b32.xlu0 %v435, 64
    %v460 = vpop.permute.xlu0 %459
    %v462 = vsel %vm81, %v460, 0
    %464 = vmatprep.subr.bf16.mxu0 0
    %465 = vmatpush1.bf16.msra.mxu0 %v77
    %466 = vmatprep.subr.bf16.mxu0 0
    %467 = vmatpush1.bf16.msra.mxu0 %v78
    %468 = vmatprep.subr.bf16.mxu0 0
    %469 = vmatpush1.bf16.msra.mxu0 0
    %470 = vmatprep.subr.bf16.mxu0 0
    %471 = vmatpush1.bf16.msra.mxu0 0
    %472 = vmatprep.subr.bf16.mxu0 0
    %473 = vmatpush1.bf16.msra.mxu0 0
    %474 = vmatprep.subr.bf16.mxu0 0
    %475 = vmatpush1.bf16.msra.mxu0 0
    %476 = vmatprep.subr.bf16.mxu0 0
    %477 = vmatpush1.bf16.msra.mxu0 0
    %478 = vmatprep.subr.bf16.mxu0 0
    %479 = vmatpush1.bf16.msra.mxu0 0
    %480 = vmatprep.subr.bf16.mxu0 0
    %481 = vmatpush1.bf16.msra.mxu0 0
    %482 = vmatprep.subr.bf16.mxu0 0
    %483 = vmatpush1.bf16.msra.mxu0 0
    %484 = vmatprep.subr.bf16.mxu0 0
    %485 = vmatpush1.bf16.msra.mxu0 0
    %486 = vmatprep.subr.bf16.mxu0 0
    %487 = vmatpush1.bf16.msra.mxu0 0
    %488 = vmatprep.subr.bf16.mxu0 0
    %489 = vmatpush1.bf16.msra.mxu0 0
    %490 = vmatprep.subr.bf16.mxu0 0
    %491 = vmatpush1.bf16.msra.mxu0 0
    %492 = vmatprep.subr.bf16.mxu0 0
    %493 = vmatpush1.bf16.msra.mxu0 0
    %494 = vmatprep.subr.bf16.mxu0 0
    %495 = vmatpush1.bf16.msra.mxu0 0
    %496 = vmatprep.mubr.bf16.mxu0 0
    %497 = vmatmul.mubr.bf16.gmra.mrb[0].mxu0 %v462
    %v498 = vpop.f32.mrb[0].mxu0
    %v499 = vadd.f32 0.0, %v498
    %v500 = vpop.f32.mrb[0].mxu0
    %v501 = vpop.f32.mrb[0].mxu0
    %v502 = vpop.f32.mrb[0].mxu0
    %503 = vdwg.mxu0
    %v504 = vadd.f32 %v458, %v499
    %v505 = vmul.f32 %v504, 0.5
    %v506 = vtanh.pop %v505
    %v507 = vmul.f32 %v506, 0.5
    %v508 = vadd.f32 %v507, 0.5
    %v509 = vtanh.pop %v504
    %v510 = vmul.f32 %v508, %v428
    %512 = vrot.lane.b32.xlu0 %v509, 32
    %v513 = vpop.permute.xlu0 %512
    %v515 = vmul.f32 %v508, %v513
    %517 = vrot.lane.b32.xlu0 %v515, 32
    %v518 = vpop.permute.xlu0 %517
    %v520 = vadd.f32 %v510, %v518
    %v521 = vtanh.pop %v520
    %523 = vrot.lane.b32.xlu0 %v521, 32
    %v524 = vpop.permute.xlu0 %523
    %v526 = vmul.f32 %v508, %v524
    %v527 = vpack.c.bf16 %v526, %v526
    %v530 = vunpack.c.l.s4 1966171168
    %v531 = vunpack.c.0.s8 %v530
    %v532 = vlaneseq
    %v533 = vshrl.u32 %v532, 7
    %v534 = vsub.s32 %v531, %v533
    %v535 = vrot.slane %v527, %v534
    %v537 = vunpack.c.l.s4 1966171168
    %v538 = vunpack.c.0.s8 %v537
    %v539 = vlaneseq
    %v540 = vshrl.u32 %v539, 7
    %v541 = vsub.s32 %v538, %v540
    %v542 = vrot.slane %v535, %v541
    %543 = vrot.lane.b32.xlu0 %v542, 64
    %v544 = vpop.permute.xlu0 %543
    %s546 = scalar_lea.vmem [#allocation9], 4
    %547 = vst.msk [vmem:[%s546] sm:$0x1] %vm178, %v544
    %s548 = scalar_lea.vmem [#allocation4], 5
    %v549 = vld [vmem:[%s548] sm:$0x1]
    %v550 = vunpack.c.l.bf16 %v549
    %551 = vrot.lane.b32.xlu0 %v527, 64
    %v552 = vpop.permute.xlu0 %551
    %v554 = vsel %vm81, %v552, 0
    %556 = vmatprep.subr.bf16.mxu0 0
    %557 = vmatpush1.bf16.msra.mxu0 %v77
    %558 = vmatprep.subr.bf16.mxu0 0
    %559 = vmatpush1.bf16.msra.mxu0 %v78
    %560 = vmatprep.subr.bf16.mxu0 0
    %561 = vmatpush1.bf16.msra.mxu0 0
    %562 = vmatprep.subr.bf16.mxu0 0
    %563 = vmatpush1.bf16.msra.mxu0 0
    %564 = vmatprep.subr.bf16.mxu0 0
    %565 = vmatpush1.bf16.msra.mxu0 0
    %566 = vmatprep.subr.bf16.mxu0 0
    %567 = vmatpush1.bf16.msra.mxu0 0
    %568 = vmatprep.subr.bf16.mxu0 0
    %569 = vmatpush1.bf16.msra.mxu0 0
    %570 = vmatprep.subr.bf16.mxu0 0
    %571 = vmatpush1.bf16.msra.mxu0 0
    %572 = vmatprep.subr.bf16.mxu0 0
    %573 = vmatpush1.bf16.msra.mxu0 0
    %574 = vmatprep.subr.bf16.mxu0 0
    %575 = vmatpush1.bf16.msra.mxu0 0
    %576 = vmatprep.subr.bf16.mxu0 0
    %577 = vmatpush1.bf16.msra.mxu0 0
    %578 = vmatprep.subr.bf16.mxu0 0
    %579 = vmatpush1.bf16.msra.mxu0 0
    %580 = vmatprep.subr.bf16.mxu0 0
    %581 = vmatpush1.bf16.msra.mxu0 0
    %582 = vmatprep.subr.bf16.mxu0 0
    %583 = vmatpush1.bf16.msra.mxu0 0
    %584 = vmatprep.subr.bf16.mxu0 0
    %585 = vmatpush1.bf16.msra.mxu0 0
    %586 = vmatprep.subr.bf16.mxu0 0
    %587 = vmatpush1.bf16.msra.mxu0 0
    %588 = vmatprep.mubr.bf16.mxu0 0
    %589 = vmatmul.mubr.bf16.gmra.mrb[0].mxu0 %v554
    %v590 = vpop.f32.mrb[0].mxu0
    %v591 = vadd.f32 0.0, %v590
    %v592 = vpop.f32.mrb[0].mxu0
    %v593 = vpop.f32.mrb[0].mxu0
    %v594 = vpop.f32.mrb[0].mxu0
    %595 = vdwg.mxu0
    %v596 = vadd.f32 %v550, %v591
    %v597 = vmul.f32 %v596, 0.5
    %v598 = vtanh.pop %v597
    %v599 = vmul.f32 %v598, 0.5
    %v600 = vadd.f32 %v599, 0.5
    %v601 = vtanh.pop %v596
    %v602 = vmul.f32 %v600, %v520
    %604 = vrot.lane.b32.xlu0 %v601, 32
    %v605 = vpop.permute.xlu0 %604
    %v607 = vmul.f32 %v600, %v605
    %609 = vrot.lane.b32.xlu0 %v607, 32
    %v610 = vpop.permute.xlu0 %609
    %v612 = vadd.f32 %v602, %v610
    %v613 = vtanh.pop %v612
    %615 = vrot.lane.b32.xlu0 %v613, 32
    %v616 = vpop.permute.xlu0 %615
    %v618 = vmul.f32 %v600, %v616
    %v619 = vpack.c.bf16 %v618, %v618
    %v622 = vunpack.c.l.s4 1966171168
    %v623 = vunpack.c.0.s8 %v622
    %v624 = vlaneseq
    %v625 = vshrl.u32 %v624, 7
    %v626 = vsub.s32 %v623, %v625
    %v627 = vrot.slane %v619, %v626
    %v629 = vunpack.c.l.s4 1966171168
    %v630 = vunpack.c.0.s8 %v629
    %v631 = vlaneseq
    %v632 = vshrl.u32 %v631, 7
    %v633 = vsub.s32 %v630, %v632
    %v634 = vrot.slane %v627, %v633
    %635 = vrot.lane.b32.xlu0 %v634, 64
    %v636 = vpop.permute.xlu0 %635
    %s638 = scalar_lea.vmem [#allocation9], 5
    %639 = vst.msk [vmem:[%s638] sm:$0x1] %vm178, %v636
    %s640 = scalar_lea.vmem [#allocation4], 6
    %v641 = vld [vmem:[%s640] sm:$0x1]
    %v642 = vunpack.c.l.bf16 %v641
    %643 = vrot.lane.b32.xlu0 %v619, 64
    %v644 = vpop.permute.xlu0 %643
    %v646 = vsel %vm81, %v644, 0
    %648 = vmatprep.subr.bf16.mxu0 0
    %649 = vmatpush1.bf16.msra.mxu0 %v77
    %650 = vmatprep.subr.bf16.mxu0 0
    %651 = vmatpush1.bf16.msra.mxu0 %v78
    %652 = vmatprep.subr.bf16.mxu0 0
    %653 = vmatpush1.bf16.msra.mxu0 0
    %654 = vmatprep.subr.bf16.mxu0 0
    %655 = vmatpush1.bf16.msra.mxu0 0
    %656 = vmatprep.subr.bf16.mxu0 0
    %657 = vmatpush1.bf16.msra.mxu0 0
    %658 = vmatprep.subr.bf16.mxu0 0
    %659 = vmatpush1.bf16.msra.mxu0 0
    %660 = vmatprep.subr.bf16.mxu0 0
    %661 = vmatpush1.bf16.msra.mxu0 0
    %662 = vmatprep.subr.bf16.mxu0 0
    %663 = vmatpush1.bf16.msra.mxu0 0
    %664 = vmatprep.subr.bf16.mxu0 0
    %665 = vmatpush1.bf16.msra.mxu0 0
    %666 = vmatprep.subr.bf16.mxu0 0
    %667 = vmatpush1.bf16.msra.mxu0 0
    %668 = vmatprep.subr.bf16.mxu0 0
    %669 = vmatpush1.bf16.msra.mxu0 0
    %670 = vmatprep.subr.bf16.mxu0 0
    %671 = vmatpush1.bf16.msra.mxu0 0
    %672 = vmatprep.subr.bf16.mxu0 0
    %673 = vmatpush1.bf16.msra.mxu0 0
    %674 = vmatprep.subr.bf16.mxu0 0
    %675 = vmatpush1.bf16.msra.mxu0 0
    %676 = vmatprep.subr.bf16.mxu0 0
    %677 = vmatpush1.bf16.msra.mxu0 0
    %678 = vmatprep.subr.bf16.mxu0 0
    %679 = vmatpush1.bf16.msra.mxu0 0
    %680 = vmatprep.mubr.bf16.mxu0 0
    %681 = vmatmul.mubr.bf16.gmra.mrb[0].mxu0 %v646
    %v682 = vpop.f32.mrb[0].mxu0
    %v683 = vadd.f32 0.0, %v682
    %v684 = vpop.f32.mrb[0].mxu0
    %v685 = vpop.f32.mrb[0].mxu0
    %v686 = vpop.f32.mrb[0].mxu0
    %687 = vdwg.mxu0
    %v688 = vadd.f32 %v642, %v683
    %v689 = vmul.f32 %v688, 0.5
    %v690 = vtanh.pop %v689
    %v691 = vmul.f32 %v690, 0.5
    %v692 = vadd.f32 %v691, 0.5
    %v693 = vtanh.pop %v688
    %v694 = vmul.f32 %v692, %v612
    %696 = vrot.lane.b32.xlu0 %v693, 32
    %v697 = vpop.permute.xlu0 %696
    %v699 = vmul.f32 %v692, %v697
    %701 = vrot.lane.b32.xlu0 %v699, 32
    %v702 = vpop.permute.xlu0 %701
    %v704 = vadd.f32 %v694, %v702
    %v705 = vtanh.pop %v704
    %707 = vrot.lane.b32.xlu0 %v705, 32
    %v708 = vpop.permute.xlu0 %707
    %v710 = vmul.f32 %v692, %v708
    %v711 = vpack.c.bf16 %v710, %v710
    %v714 = vunpack.c.l.s4 1966171168
    %v715 = vunpack.c.0.s8 %v714
    %v716 = vlaneseq
    %v717 = vshrl.u32 %v716, 7
    %v718 = vsub.s32 %v715, %v717
    %v719 = vrot.slane %v711, %v718
    %v721 = vunpack.c.l.s4 1966171168
    %v722 = vunpack.c.0.s8 %v721
    %v723 = vlaneseq
    %v724 = vshrl.u32 %v723, 7
    %v725 = vsub.s32 %v722, %v724
    %v726 = vrot.slane %v719, %v725
    %727 = vrot.lane.b32.xlu0 %v726, 64
    %v728 = vpop.permute.xlu0 %727
    %s730 = scalar_lea.vmem [#allocation9], 6
    %731 = vst.msk [vmem:[%s730] sm:$0x1] %vm178, %v728
    %s732 = scalar_lea.vmem [#allocation4], 7
    %v733 = vld [vmem:[%s732] sm:$0x1]
    %v734 = vunpack.c.l.bf16 %v733
    %735 = vrot.lane.b32.xlu0 %v711, 64
    %v736 = vpop.permute.xlu0 %735
    %v738 = vsel %vm81, %v736, 0
    %740 = vmatprep.subr.bf16.mxu0 0
    %741 = vmatpush1.bf16.msra.mxu0 %v77
    %742 = vmatprep.subr.bf16.mxu0 0
    %743 = vmatpush1.bf16.msra.mxu0 %v78
    %744 = vmatprep.subr.bf16.mxu0 0
    %745 = vmatpush1.bf16.msra.mxu0 0
    %746 = vmatprep.subr.bf16.mxu0 0
    %747 = vmatpush1.bf16.msra.mxu0 0
    %748 = vmatprep.subr.bf16.mxu0 0
    %749 = vmatpush1.bf16.msra.mxu0 0
    %750 = vmatprep.subr.bf16.mxu0 0
    %751 = vmatpush1.bf16.msra.mxu0 0
    %752 = vmatprep.subr.bf16.mxu0 0
    %753 = vmatpush1.bf16.msra.mxu0 0
    %754 = vmatprep.subr.bf16.mxu0 0
    %755 = vmatpush1.bf16.msra.mxu0 0
    %756 = vmatprep.subr.bf16.mxu0 0
    %757 = vmatpush1.bf16.msra.mxu0 0
    %758 = vmatprep.subr.bf16.mxu0 0
    %759 = vmatpush1.bf16.msra.mxu0 0
    %760 = vmatprep.subr.bf16.mxu0 0
    %761 = vmatpush1.bf16.msra.mxu0 0
    %762 = vmatprep.subr.bf16.mxu0 0
    %763 = vmatpush1.bf16.msra.mxu0 0
    %764 = vmatprep.subr.bf16.mxu0 0
    %765 = vmatpush1.bf16.msra.mxu0 0
    %766 = vmatprep.subr.bf16.mxu0 0
    %767 = vmatpush1.bf16.msra.mxu0 0
    %768 = vmatprep.subr.bf16.mxu0 0
    %769 = vmatpush1.bf16.msra.mxu0 0
    %770 = vmatprep.subr.bf16.mxu0 0
    %771 = vmatpush1.bf16.msra.mxu0 0
    %772 = vmatprep.mubr.bf16.mxu0 0
    %773 = vmatmul.mubr.bf16.gmra.mrb[0].mxu0 %v738
    %v774 = vpop.f32.mrb[0].mxu0
    %v775 = vadd.f32 0.0, %v774
    %v776 = vpop.f32.mrb[0].mxu0
    %v777 = vpop.f32.mrb[0].mxu0
    %v778 = vpop.f32.mrb[0].mxu0
    %779 = vdwg.mxu0
    %v780 = vadd.f32 %v734, %v775
    %v781 = vmul.f32 %v780, 0.5
    %v782 = vtanh.pop %v781
    %v783 = vmul.f32 %v782, 0.5
    %v784 = vadd.f32 %v783, 0.5
    %v785 = vtanh.pop %v780
    %v786 = vmul.f32 %v784, %v704
    %788 = vrot.lane.b32.xlu0 %v785, 32
    %v789 = vpop.permute.xlu0 %788
    %v791 = vmul.f32 %v784, %v789
    %793 = vrot.lane.b32.xlu0 %v791, 32
    %v794 = vpop.permute.xlu0 %793
    %v796 = vadd.f32 %v786, %v794
    %v797 = vtanh.pop %v796
    %799 = vrot.lane.b32.xlu0 %v797, 32
    %v800 = vpop.permute.xlu0 %799
    %v802 = vmul.f32 %v784, %v800
    %v803 = vpack.c.bf16 %v802, %v802
    %v806 = vunpack.c.l.s4 1966171168
    %v807 = vunpack.c.0.s8 %v806
    %v808 = vlaneseq
    %v809 = vshrl.u32 %v808, 7
    %v810 = vsub.s32 %v807, %v809
    %v811 = vrot.slane %v803, %v810
    %v813 = vunpack.c.l.s4 1966171168
    %v814 = vunpack.c.0.s8 %v813
    %v815 = vlaneseq
    %v816 = vshrl.u32 %v815, 7
    %v817 = vsub.s32 %v814, %v816
    %v818 = vrot.slane %v811, %v817
    %819 = vrot.lane.b32.xlu0 %v818, 64
    %v820 = vpop.permute.xlu0 %819
    %s822 = scalar_lea.vmem [#allocation9], 7
    %823 = vst.msk [vmem:[%s822] sm:$0x1] %vm178, %v820
    %v826 = vunpack.c.l.s4 1983009808
    %v827 = vunpack.c.0.s8 %v826
    %v828 = vlaneseq
    %v829 = vshrl.u32 %v828, 7
    %v830 = vsub.s32 %v827, %v829
    %v831 = vrot.slane %v802, %v830
    %832 = vrot.lane.b32.xlu0 %v831, 64
    %v833 = vpop.permute.xlu0 %832
    %vm835 = vcmask 254976
    %836 = vst.msk [vmem:[#allocation2] sm:$0x3] %vm835, %v833
    %v839 = vunpack.c.l.s4 1983009808
    %v840 = vunpack.c.0.s8 %v839
    %v841 = vlaneseq
    %v842 = vshrl.u32 %v841, 7
    %v843 = vsub.s32 %v840, %v842
    %v844 = vrot.slane %v796, %v843
    %845 = vrot.lane.b32.xlu0 %v844, 96
    %v846 = vpop.permute.xlu0 %845
    %848 = vst.msk [vmem:[#allocation3] sm:$0x3] %vm835, %v846
    // Predicated region
    $region30: #{tpu_custom_call.1} parent=1 // pred_check
      %p849 = pneg %p51
    $region31: #{tpu_custom_call.1} parent=1 // pred_check_branch
      %851 = sbr.rel (%p849) target = $region33
    $region32: #{tpu_custom_call.1} parent=1 // pred_region
      %v852 = vld [vmem:[#allocation2] sm:$0x3]
      %853 = vst.msk [vmem:[#allocation10] sm:$0x3] %vm835, %v852
      %v854 = vld [vmem:[#allocation3] sm:$0x3]
      %855 = vst.msk [vmem:[#allocation12] sm:$0x3] %vm835, %v854
    $region33: #{tpu_custom_call.1} parent=1 // pred_fallthru
      _
    // Predicated region
    $region34: #{tpu_custom_call.1} parent=1 // pred_check
      _
    $region35: #{tpu_custom_call.1} parent=1 // pred_check_branch
      %857 = sbr.rel (0) target = $region37
    $region36: #{tpu_custom_call.1} parent=1 // pred_region
      %s859 = ssub.s32 128, 128
      %860 = vsyncadd [#allocation6], %s859
      %s861 = sshll.u32 [#allocation9], 4
      %s862 = int_to_ptr.vmem [resolvable:$true] %s861
      %867 = dma.vmem_to_hbm [thread:$0]  %s862, 128, %s4, [#allocation6], 16, 16, 1
    $region37: #{tpu_custom_call.1} parent=1 // pred_fallthru
      _
    // Predicated region
    $region38: #{tpu_custom_call.1} parent=1 // pred_check
      _
    $region39: #{tpu_custom_call.1} parent=1 // pred_check_branch
      %869 = sbr.rel (0) target = $region41
    $region40: #{tpu_custom_call.1} parent=1 // pred_region
      %s871 = ssub.s32 32, 32
      %872 = vsyncadd [#allocation11], %s871
      %s874 = sshll.u32 [#allocation10], 4
      %s875 = int_to_ptr.vmem [resolvable:$true] %s874
      %877 = dma.vmem_to_hbm [thread:$0]  %s875, 32, %s5, [#allocation11]
    $region41: #{tpu_custom_call.1} parent=1 // pred_fallthru
      _
    // Predicated region
    $region42: #{tpu_custom_call.1} parent=1 // pred_check
      _
    $region43: #{tpu_custom_call.1} parent=1 // pred_check_branch
      %879 = sbr.rel (0) target = $region45
    $region44: #{tpu_custom_call.1} parent=1 // pred_region
      %s881 = ssub.s32 32, 32
      %882 = vsyncadd [#allocation11], %s881
      %s884 = sshll.u32 [#allocation12], 4
      %s885 = int_to_ptr.vmem [resolvable:$true] %s884
      %887 = dma.vmem_to_hbm [thread:$0]  %s885, 32, %s6, [#allocation11]
    $region45: #{tpu_custom_call.1} parent=1 // pred_fallthru
      _
    // Predicated region
    $region46: #{tpu_custom_call.1} parent=1 // pred_check
      _
    $region47: #{tpu_custom_call.1} parent=1 // pred_check_branch
      %889 = sbr.rel (0) target = $region49
    $region48: #{tpu_custom_call.1} parent=1 // pred_region
      %890 = dma.done [#allocation6], 128
    $region49: #{tpu_custom_call.1} parent=1 // pred_fallthru
      _
    // Predicated region
    $region50: #{tpu_custom_call.1} parent=1 // pred_check
      _
    $region51: #{tpu_custom_call.1} parent=1 // pred_check_branch
      %892 = sbr.rel (0) target = $region53
    $region52: #{tpu_custom_call.1} parent=1 // pred_region
      %893 = dma.done [#allocation11], 32
    $region53: #{tpu_custom_call.1} parent=1 // pred_fallthru
      _
    // Predicated region
    $region54: #{tpu_custom_call.1} parent=1 // pred_check
      _
    $region55: #{tpu_custom_call.1} parent=1 // pred_check_branch
      %895 = sbr.rel (0) target = $region57
    $region56: #{tpu_custom_call.1} parent=1 // pred_region
      %896 = dma.done [#allocation11], 32
    $region57: #{tpu_custom_call.1} parent=1 // pred_fallthru
      _
    %897 = vsyncpa [#allocation5], 1
    %898 = vsyncpa [#allocation8], 1
    %899 = vsyncpa [#allocation6], 1
    %900 = vsyncpa [#allocation11], 1

</llo_original>
